<compile_context>
chip_gen: v7x
topology: tpu7x:2x2x1
jax: 0.10.0
libtpu: 0.0.40
codegen_flags: <defaults>
</compile_context>

<pallas_src>
import functools

import numpy as np
import jax
import jax.numpy as jnp
from jax.experimental import pallas as pl
from jax.experimental.pallas import tpu as pltpu

CENTERLINE_LENGTH = 40
H_DIM = 128
NUM_ATTENTION_HEADS = 4
NUM_CENTERLINES = 3
EPS_BN = 1e-5
EPS_LN = 1e-5
NEG_INF = -1e9
SUPERBLOCK_TARGET_ROWS = 128          # padded rows per grid step (128 fills an MXU pass)
PREC = jax.lax.Precision.HIGHEST      # reference-side matmul precision (matches f32 kernel)


# ---------------------------------------------------------------------------
# Small helper: stack n copies of x along the leading (sublane-major) axis.
# (a, e) -> (n*a, e) via broadcast + leading-dim merge (tile-aligned: a % 8 == 0).
# ---------------------------------------------------------------------------
def _rep_rows(x, n):
    a, e = x.shape
    return jnp.broadcast_to(x[None], (n, a, e)).reshape(n * a, e)


# ---------------------------------------------------------------------------
# Fused Pallas kernel: one grid step == one superblock of S samples (R padded rows)
# ---------------------------------------------------------------------------
def fused_map_subnet_kernel(
        x_ref, mask_ref, hm0_ref, hm1_ref,
        w0_ref, b0_ref, wqkv0_ref, bqkv0_ref, wo0_ref, bo0_ref, lng0_ref, lnb0_ref,
        w1_ref, b1_ref, wqkv1_ref, bqkv1_ref, wo1_ref, bo1_ref, lng1_ref, lnb1_ref,
        o_ref, *, num_heads):
    """Both MapSubNet layers for one superblock, entirely in VMEM."""
    # Block-diagonal (same-sample AND valid-key) additive mask, replicated per head block.
    mask_hr = _rep_rows(mask_ref[0], num_heads)                  # (H*R, R)

    def attn_ln_relu(h, hm_ref, wqkv_ref, bqkv_ref, wo_ref, bo_ref, g_ref, beta_ref):
        a, e = h.shape

        # Fused, scale-folded QKV projection: one lane-dense (E, 3E) matmul.
        qkv = jnp.dot(h, wqkv_ref[...],
                      preferred_element_type=jnp.float32) + bqkv_ref[...]
        q, k, v = qkv[:, :e], qkv[:, e:2 * e], qkv[:, 2 * e:]

        # Head-batched attention with 2-D matmuls only: replicate q once per head along
        # the sublane axis and zero the columns not belonging to that head (hm_ref is a
        # precomputed VMEM-resident constant), so a SINGLE MXU matmul yields all per-head
        # score blocks stacked as (H*R, R).
        q_rep = _rep_rows(q, num_heads) * hm_ref[...]            # (H*R, E)
        s = jnp.einsum('re,ke->rk', q_rep, k,
                       preferred_element_type=jnp.float32)      # (H*R, R)
        s = s + mask_hr                                          # per-sample key mask
        s = s - jnp.max(s, axis=-1, keepdims=True)
        p = jnp.exp(s)
        p = p / jnp.sum(p, axis=-1, keepdims=True)               # exact softmax

        # ctx_all[h*R + i, :] = p_h[i, :] @ v ; keep only head h's columns and collapse
        # the per-head row blocks back to (R, E).
        ctx_all = jnp.dot(p, v, preferred_element_type=jnp.float32)   # (H*R, E)
        ctx = jnp.sum((ctx_all * hm_ref[...]).reshape(num_heads, a, e), axis=0)

        # Residual + LayerNorm + ReLU (residual == attention input, as in PyTorch).
        y = h + jnp.dot(ctx, wo_ref[...],
                        preferred_element_type=jnp.float32) + bo_ref[...]
        mu = jnp.mean(y, axis=-1, keepdims=True)
        var = jnp.mean(jnp.square(y - mu), axis=-1, keepdims=True)
        y = (y - mu) * jax.lax.rsqrt(var + EPS_LN) * g_ref[...] + beta_ref[...]
        return jnp.maximum(y, 0.0)

    # Layer 0 (E = H_DIM // 4): BN already folded into w0/b0; stays in vregs/VMEM.
    h = jnp.dot(x_ref[...], w0_ref[...],
                preferred_element_type=jnp.float32) + b0_ref[...]
    h = jnp.maximum(h, 0.0)
    h = attn_ln_relu(h, hm0_ref, wqkv0_ref, bqkv0_ref, wo0_ref, bo0_ref,
                     lng0_ref, lnb0_ref)

    # Layer 1 (E = H_DIM): only this lane-dense (R, 128) tile is written back to HBM.
    h = jnp.dot(h, w1_ref[...], preferred_element_type=jnp.float32) + b1_ref[...]
    h = jnp.maximum(h, 0.0)
    o_ref[...] = attn_ln_relu(h, hm1_ref, wqkv1_ref, bqkv1_ref, wo1_ref, bo1_ref,
                              lng1_ref, lnb1_ref)


# ---------------------------------------------------------------------------
# Trace-time parameter folding (BN -> Linear, scale -> Wq, fused QKV)
# ---------------------------------------------------------------------------
def _fold_layer(lp):
    s = lp["bn_g"] * jax.lax.rsqrt(lp["bn_v"] + EPS_BN)          # (1, dout)
    w_f = lp["w"] * s
    b_f = (lp["b"] - lp["bn_m"]) * s + lp["bn_b"]
    dout = lp["w"].shape[1]
    scale = 1.0 / float(np.sqrt(dout // NUM_ATTENTION_HEADS))
    wqkv = jnp.concatenate([lp["wq"] * scale, lp["wk"], lp["wv"]], axis=1)
    bqkv = jnp.concatenate([lp["bq"] * scale, lp["bk"], lp["bv"]], axis=1)
    return (w_f, b_f, wqkv, bqkv, lp["wo"], lp["bo"], lp["ln_g"], lp["ln_b"])


# ---------------------------------------------------------------------------
# MapSubNet forward (single fused pallas_call, superblocked grid)
# ---------------------------------------------------------------------------
@functools.partial(jax.jit, static_argnames=("counts",))
def map_subnet_forward(centerlines, counts, params):
    n = centerlines.shape[0]
    in_dim = centerlines.shape[1] * centerlines.shape[2]
    in_pad = max(128, ((in_dim + 127) // 128) * 128)             # lane-dense x tile
    x = centerlines.reshape(n, in_dim).astype(jnp.float32)       # == centerlines.view(N, -1)

    batch = len(counts)
    max_a = max(counts)
    a_pad = max(8, ((max_a + 7) // 8) * 8)                       # f32 sublane alignment

    # --- superblocking: pack S samples (~SUPERBLOCK_TARGET_ROWS rows) per grid step ---
    s_per_step = max(1, min(batch, SUPERBLOCK_TARGET_ROWS // a_pad))
    num_steps = -(-batch // s_per_step)
    batch_pad = num_steps * s_per_step                           # pad with empty samples
    rows_step = s_per_step * a_pad
    rows = num_steps * rows_step

    # --- static padding indices, block-diag mask & head masks (trace-time numpy) ---
    offs = np.concatenate([[0], np.cumsum(counts)[:-1]]).astype(np.int64)
    gather = np.zeros((batch_pad, a_pad), np.int32)
    valid = np.zeros((batch_pad, a_pad), np.float32)
    unpad = []
    for i, c in enumerate(counts):
        gather[i, :c] = offs[i] + np.arange(c)
        valid[i, :c] = 1.0
        unpad.extend(range(i * a_pad, i * a_pad + c))
    unpad_idx = jnp.asarray(np.asarray(unpad, np.int32))

    x_rows = x[jnp.asarray(gather.reshape(-1))] * jnp.asarray(valid.reshape(-1, 1))
    x_rows = jnp.pad(x_rows, ((0, 0), (0, in_pad - in_dim)))     # (rows, in_pad)

    # Per-step block-diagonal additive key mask: query row i may attend key row j iff
    # same sample within the superblock AND key row j is a valid (non-padded) row.
    sid = np.arange(rows_step) // a_pad
    same = sid[:, None] == sid[None, :]
    key_valid = valid.reshape(num_steps, rows_step) > 0
    mask_add = jnp.asarray(
        np.where(same[None] & key_valid[:, None, :], 0.0, NEG_INF).astype(np.float32))

    def head_mask(e):                                            # hoisted out of kernel
        dh = e // NUM_ATTENTION_HEADS
        row_head = np.arange(NUM_ATTENTION_HEADS * rows_step)[:, None] // rows_step
        col_head = np.arange(e)[None, :] // dh
        return jnp.asarray((row_head == col_head).astype(np.float32))

    hm0 = head_mask(H_DIM // 4)                                  # (4*R, 32)
    hm1 = head_mask(H_DIM)                                       # (4*R, 128)

    p0 = _fold_layer(params["layer0"])
    p0 = (jnp.pad(p0[0], ((0, in_pad - in_dim), (0, 0))),) + p0[1:]   # zero rows for x pad
    p1 = _fold_layer(params["layer1"])

    def _const_spec(t):
        nd = t.ndim
        return pl.BlockSpec(t.shape, lambda b: (0,) * nd)

    out_pad = pl.pallas_call(
        functools.partial(fused_map_subnet_kernel, num_heads=NUM_ATTENTION_HEADS),
        out_shape=jax.ShapeDtypeStruct((rows, H_DIM), jnp.float32),
        grid=(num_steps,),
        in_specs=[pl.BlockSpec((rows_step, in_pad), lambda b: (b, 0)),
                  pl.BlockSpec((1, rows_step, rows_step), lambda b: (b, 0, 0)),
                  _const_spec(hm0), _const_spec(hm1)]
                 + [_const_spec(t) for t in (*p0, *p1)],
        out_specs=pl.BlockSpec((rows_step, H_DIM), lambda b: (b, 0)),
        compiler_params=pltpu.CompilerParams(dimension_semantics=("parallel",)),
    )(x_rows, mask_add, hm0, hm1, *p0, *p1)

    return out_pad[unpad_idx]                                    # unpad once, at the end


# ---------------------------------------------------------------------------
# Deterministic parameter init (shapes from MapSubNet.__init__)
# ---------------------------------------------------------------------------
def init_params(key):
    dims = [(2 * CENTERLINE_LENGTH, H_DIM // 4), (H_DIM // 4, H_DIM)]
    keys = jax.random.split(key, 32)
    ki = [0]

    def nxt():
        k = keys[ki[0]]
        ki[0] += 1
        return k

    params = {}
    for layer, (din, dout) in enumerate(dims):
        lp = {}
        lp["w"] = 0.1 * jax.random.normal(nxt(), (din, dout), jnp.float32)
        lp["b"] = 0.1 * jax.random.normal(nxt(), (1, dout), jnp.float32)
        lp["bn_g"] = 1.0 + 0.1 * jax.random.normal(nxt(), (1, dout), jnp.float32)
        lp["bn_b"] = 0.1 * jax.random.normal(nxt(), (1, dout), jnp.float32)
        lp["bn_m"] = 0.1 * jax.random.normal(nxt(), (1, dout), jnp.float32)
        lp["bn_v"] = 1.0 + 0.1 * jax.random.uniform(nxt(), (1, dout), jnp.float32)
        for name in ("wq", "wk", "wv", "wo"):
            lp[name] = 0.1 * jax.random.normal(nxt(), (dout, dout), jnp.float32)
        for name in ("bq", "bk", "bv", "bo"):
            lp[name] = 0.1 * jax.random.normal(nxt(), (1, dout), jnp.float32)
        lp["ln_g"] = 1.0 + 0.1 * jax.random.normal(nxt(), (1, dout), jnp.float32)
        lp["ln_b"] = 0.1 * jax.random.normal(nxt(), (1, dout), jnp.float32)
        params[f"layer{layer}"] = lp
    return params


# ---------------------------------------------------------------------------
# Pure-JAX reference (same eval-mode math, HIGHEST-precision matmuls) for a sanity check
# ---------------------------------------------------------------------------
def build_pad_info(counts):
    max_a = max(counts)
    b = len(counts)
    offs = np.concatenate([[0], np.cumsum(counts)[:-1]]).astype(np.int64)
    gather_idx = np.zeros((b, max_a), np.int32)
    valid = np.zeros((b, max_a), bool)
    for i, c in enumerate(counts):
        for a in range(max_a):
            if a < c:
                gather_idx[i, a] = offs[i] + a
                valid[i, a] = True
    return gather_idx, valid


def reference_forward(centerlines, counts, params):
    n = centerlines.shape[0]
    gather_idx, valid = build_pad_info(counts)
    batch, max_a = valid.shape
    unpad_idx = np.nonzero(valid.reshape(-1))[0]
    mask_add = jnp.asarray(np.where(valid, 0.0, NEG_INF).astype(np.float32))

    h = centerlines.reshape(n, -1).astype(jnp.float32)
    for layer in (0, 1):
        lp = params[f"layer{layer}"]
        h = jnp.dot(h, lp["w"], precision=PREC) + lp["b"]
        h = (h - lp["bn_m"]) * jax.lax.rsqrt(lp["bn_v"] + EPS_BN) * lp["bn_g"] + lp["bn_b"]
        h = jnp.maximum(h, 0.0)
        e = h.shape[-1]
        dh = e // NUM_ATTENTION_HEADS

        hp = h[jnp.asarray(gather_idx.reshape(-1))] * jnp.asarray(
            valid.reshape(-1, 1).astype(np.float32))
        q = (jnp.dot(hp, lp["wq"], precision=PREC) + lp["bq"]).reshape(
            batch, max_a, NUM_ATTENTION_HEADS, dh)
        k = (jnp.dot(hp, lp["wk"], precision=PREC) + lp["bk"]).reshape(
            batch, max_a, NUM_ATTENTION_HEADS, dh)
        v = (jnp.dot(hp, lp["wv"], precision=PREC) + lp["bv"]).reshape(
            batch, max_a, NUM_ATTENTION_HEADS, dh)
        s = jnp.einsum('bqhd,bkhd->bhqk', q, k, precision=PREC) / np.sqrt(dh)
        s = s + mask_add[:, None, None, :]
        p = jax.nn.softmax(s, axis=-1)
        ctx = jnp.einsum('bhqk,bkhd->bqhd', p, v,
                         precision=PREC).reshape(batch * max_a, e)
        attn = jnp.dot(ctx, lp["wo"], precision=PREC) + lp["bo"]
        y = (hp + attn)[unpad_idx]
        mu = jnp.mean(y, axis=-1, keepdims=True)
        var = jnp.mean((y - mu) ** 2, axis=-1, keepdims=True)
        y = (y - mu) * jax.lax.rsqrt(var + EPS_LN) * lp["ln_g"] + lp["ln_b"]
        h = jnp.maximum(y, 0.0)
    return h


if __name__ == "__main__":
    key = jax.random.PRNGKey(0)
    batch = 2
    counts = (NUM_CENTERLINES,) * batch          # centerlines_per_sample (static)
    n = sum(counts)                              # N = batch * NUM_CENTERLINES = 6

    k_in, k_p = jax.random.split(key)
    centerlines = jax.random.normal(k_in, (n, CENTERLINE_LENGTH, 2), jnp.float32)
    params = init_params(k_p)

    out = map_subnet_forward(centerlines, counts, params)
    out = jax.block_until_ready(out)

    ref = reference_forward(centerlines, counts, params)
    np.testing.assert_allclose(np.asarray(out), np.asarray(ref), rtol=2e-3, atol=2e-3)
    assert out.shape == (n, H_DIM)

    print("KERNEL_OK")
</pallas_src>

<mosaic_0001>
module attributes {stable_mosaic.version = 11 : i64} {
  func.func @fused_map_subnet_kernel(%arg0: i32, %arg1: memref<16x128xf32, #tpu.memory_space<vmem>>, %arg2: memref<1x16x16xf32, #tpu.memory_space<vmem>>, %arg3: memref<64x32xf32, #tpu.memory_space<vmem>>, %arg4: memref<64x128xf32, #tpu.memory_space<vmem>>, %arg5: memref<128x32xf32, #tpu.memory_space<vmem>>, %arg6: memref<1x32xf32, #tpu.memory_space<vmem>>, %arg7: memref<32x96xf32, #tpu.memory_space<vmem>>, %arg8: memref<1x96xf32, #tpu.memory_space<vmem>>, %arg9: memref<32x32xf32, #tpu.memory_space<vmem>>, %arg10: memref<1x32xf32, #tpu.memory_space<vmem>>, %arg11: memref<1x32xf32, #tpu.memory_space<vmem>>, %arg12: memref<1x32xf32, #tpu.memory_space<vmem>>, %arg13: memref<32x128xf32, #tpu.memory_space<vmem>>, %arg14: memref<1x128xf32, #tpu.memory_space<vmem>>, %arg15: memref<128x384xf32, #tpu.memory_space<vmem>>, %arg16: memref<1x384xf32, #tpu.memory_space<vmem>>, %arg17: memref<128x128xf32, #tpu.memory_space<vmem>>, %arg18: memref<1x128xf32, #tpu.memory_space<vmem>>, %arg19: memref<1x128xf32, #tpu.memory_space<vmem>>, %arg20: memref<1x128xf32, #tpu.memory_space<vmem>>, %arg21: memref<16x128xf32, #tpu.memory_space<vmem>>) attributes {dimension_semantics = [#tpu.dimension_semantics<parallel>], iteration_bounds = array<i64: 1>, scalar_prefetch = 0 : i64, scratch_operands = 0 : i64, tpu.core_type = #tpu.core_type<tc>, window_params = [{transform_indices = @transform_0, window_bounds = array<i64: 16, 128>}, {transform_indices = @transform_1, window_bounds = array<i64: 1, 16, 16>}, {pipeline_mode = #tpu.pipeline_mode<synchronous>, transform_indices = @transform_2, window_bounds = array<i64: 64, 32>}, {pipeline_mode = #tpu.pipeline_mode<synchronous>, transform_indices = @transform_3, window_bounds = array<i64: 64, 128>}, {pipeline_mode = #tpu.pipeline_mode<synchronous>, transform_indices = @transform_4, window_bounds = array<i64: 128, 32>}, {pipeline_mode = #tpu.pipeline_mode<synchronous>, transform_indices = @transform_5, window_bounds = array<i64: 1, 32>}, {pipeline_mode = #tpu.pipeline_mode<synchronous>, transform_indices = @transform_6, window_bounds = array<i64: 32, 96>}, {pipeline_mode = #tpu.pipeline_mode<synchronous>, transform_indices = @transform_7, window_bounds = array<i64: 1, 96>}, {pipeline_mode = #tpu.pipeline_mode<synchronous>, transform_indices = @transform_8, window_bounds = array<i64: 32, 32>}, {pipeline_mode = #tpu.pipeline_mode<synchronous>, transform_indices = @transform_9, window_bounds = array<i64: 1, 32>}, {pipeline_mode = #tpu.pipeline_mode<synchronous>, transform_indices = @transform_10, window_bounds = array<i64: 1, 32>}, {pipeline_mode = #tpu.pipeline_mode<synchronous>, transform_indices = @transform_11, window_bounds = array<i64: 1, 32>}, {pipeline_mode = #tpu.pipeline_mode<synchronous>, transform_indices = @transform_12, window_bounds = array<i64: 32, 128>}, {pipeline_mode = #tpu.pipeline_mode<synchronous>, transform_indices = @transform_13, window_bounds = array<i64: 1, 128>}, {pipeline_mode = #tpu.pipeline_mode<synchronous>, transform_indices = @transform_14, window_bounds = array<i64: 128, 384>}, {pipeline_mode = #tpu.pipeline_mode<synchronous>, transform_indices = @transform_15, window_bounds = array<i64: 1, 384>}, {pipeline_mode = #tpu.pipeline_mode<synchronous>, transform_indices = @transform_16, window_bounds = array<i64: 128, 128>}, {pipeline_mode = #tpu.pipeline_mode<synchronous>, transform_indices = @transform_17, window_bounds = array<i64: 1, 128>}, {pipeline_mode = #tpu.pipeline_mode<synchronous>, transform_indices = @transform_18, window_bounds = array<i64: 1, 128>}, {pipeline_mode = #tpu.pipeline_mode<synchronous>, transform_indices = @transform_19, window_bounds = array<i64: 1, 128>}, {transform_indices = @transform_20, window_bounds = array<i64: 16, 128>}]} {
    %c0 = arith.constant 0 : index
    %c0_0 = arith.constant 0 : index
    %c0_1 = arith.constant 0 : index
    %0 = vector.load %arg2[%c0, %c0_0, %c0_1] : memref<1x16x16xf32, #tpu.memory_space<vmem>>, vector<1x16x16xf32>
    %1 = vector.shape_cast %0 : vector<1x16x16xf32> to vector<16x16xf32>
    %2 = vector.shape_cast %1 : vector<16x16xf32> to vector<1x16x16xf32>
    %3 = vector.shape_cast %2 : vector<1x16x16xf32> to vector<1x16x16xf32>
    %4 = vector.broadcast %3 : vector<1x16x16xf32> to vector<4x16x16xf32>
    %5 = vector.shape_cast %4 : vector<4x16x16xf32> to vector<64x16xf32>
    %c0_2 = arith.constant 0 : index
    %c0_3 = arith.constant 0 : index
    %6 = vector.load %arg1[%c0_2, %c0_3] : memref<16x128xf32, #tpu.memory_space<vmem>>, vector<16x128xf32>
    %c0_4 = arith.constant 0 : index
    %c0_5 = arith.constant 0 : index
    %7 = vector.load %arg5[%c0_4, %c0_5] : memref<128x32xf32, #tpu.memory_space<vmem>>, vector<128x32xf32>
    %cst = arith.constant dense<0.000000e+00> : vector<16x32xf32>
    %8 = tpu.matmul %6, %7, %cst {dimension_numbers = #tpu.dot_dimension_numbers<[1], [0], [0], [1], [0, 0, 1, 1], [], []>} : vector<16x128xf32>, vector<128x32xf32>, vector<16x32xf32> -> vector<16x32xf32>
    %c0_6 = arith.constant 0 : index
    %c0_7 = arith.constant 0 : index
    %9 = vector.load %arg6[%c0_6, %c0_7] : memref<1x32xf32, #tpu.memory_space<vmem>>, vector<1x32xf32>
    %10 = vector.broadcast %9 : vector<1x32xf32> to vector<16x32xf32>
    %11 = arith.addf %8, %10 : vector<16x32xf32>
    %cst_8 = arith.constant 0.000000e+00 : f32
    %12 = vector.broadcast %cst_8 : f32 to vector<16x32xf32>
    %13 = arith.maximumf %11, %12 : vector<16x32xf32>
    %c0_9 = arith.constant 0 : index
    %c0_10 = arith.constant 0 : index
    %14 = vector.load %arg7[%c0_9, %c0_10] : memref<32x96xf32, #tpu.memory_space<vmem>>, vector<32x96xf32>
    %cst_11 = arith.constant dense<0.000000e+00> : vector<16x96xf32>
    %15 = tpu.matmul %13, %14, %cst_11 {dimension_numbers = #tpu.dot_dimension_numbers<[1], [0], [0], [1], [0, 0, 1, 1], [], []>} : vector<16x32xf32>, vector<32x96xf32>, vector<16x96xf32> -> vector<16x96xf32>
    %c0_12 = arith.constant 0 : index
    %c0_13 = arith.constant 0 : index
    %16 = vector.load %arg8[%c0_12, %c0_13] : memref<1x96xf32, #tpu.memory_space<vmem>>, vector<1x96xf32>
    %17 = vector.broadcast %16 : vector<1x96xf32> to vector<16x96xf32>
    %18 = arith.addf %15, %17 : vector<16x96xf32>
    %19 = vector.extract_strided_slice %18 {offsets = [0, 0], sizes = [16, 32], strides = [1, 1]} : vector<16x96xf32> to vector<16x32xf32>
    %20 = vector.extract_strided_slice %18 {offsets = [0, 32], sizes = [16, 32], strides = [1, 1]} : vector<16x96xf32> to vector<16x32xf32>
    %21 = vector.extract_strided_slice %18 {offsets = [0, 64], sizes = [16, 32], strides = [1, 1]} : vector<16x96xf32> to vector<16x32xf32>
    %22 = vector.shape_cast %19 : vector<16x32xf32> to vector<1x16x32xf32>
    %23 = vector.shape_cast %22 : vector<1x16x32xf32> to vector<1x16x32xf32>
    %24 = vector.broadcast %23 : vector<1x16x32xf32> to vector<4x16x32xf32>
    %25 = vector.shape_cast %24 : vector<4x16x32xf32> to vector<64x32xf32>
    %c0_14 = arith.constant 0 : index
    %c0_15 = arith.constant 0 : index
    %26 = vector.load %arg3[%c0_14, %c0_15] : memref<64x32xf32, #tpu.memory_space<vmem>>, vector<64x32xf32>
    %27 = arith.mulf %25, %26 : vector<64x32xf32>
    "tpu.trace_start"() <{level = 10 : i32, message = "re,ke->rk"}> : () -> ()
    %cst_16 = arith.constant dense<0.000000e+00> : vector<64x16xf32>
    %28 = tpu.matmul %27, %20, %cst_16 {dimension_numbers = #tpu.dot_dimension_numbers<[1], [1], [0], [0], [0, 0, 1, 0], [], []>} : vector<64x32xf32>, vector<16x32xf32>, vector<64x16xf32> -> vector<64x16xf32>
    "tpu.trace_stop"() : () -> ()
    %29 = arith.addf %28, %5 : vector<64x16xf32>
    %cst_17 = arith.constant dense<0xFF800000> : vector<64xf32>
    %30 = vector.multi_reduction <maximumf>, %29, %cst_17 [1] : vector<64x16xf32> to vector<64xf32>
    %31 = vector.shape_cast %30 : vector<64xf32> to vector<64x1xf32>
    %32 = vector.broadcast %31 : vector<64x1xf32> to vector<64x16xf32>
    %33 = arith.subf %29, %32 : vector<64x16xf32>
    %34 = math.exp %33 : vector<64x16xf32>
    %cst_18 = arith.constant dense<0.000000e+00> : vector<64xf32>
    %35 = vector.multi_reduction <add>, %34, %cst_18 [1] : vector<64x16xf32> to vector<64xf32>
    %36 = vector.shape_cast %35 : vector<64xf32> to vector<64x1xf32>
    %37 = vector.broadcast %36 : vector<64x1xf32> to vector<64x16xf32>
    %38 = arith.divf %34, %37 : vector<64x16xf32>
    %cst_19 = arith.constant dense<0.000000e+00> : vector<64x32xf32>
    %39 = tpu.matmul %38, %21, %cst_19 {dimension_numbers = #tpu.dot_dimension_numbers<[1], [0], [0], [1], [0, 0, 1, 1], [], []>} : vector<64x16xf32>, vector<16x32xf32>, vector<64x32xf32> -> vector<64x32xf32>
    %c0_20 = arith.constant 0 : index
    %c0_21 = arith.constant 0 : index
    %40 = vector.load %arg3[%c0_20, %c0_21] : memref<64x32xf32, #tpu.memory_space<vmem>>, vector<64x32xf32>
    %41 = arith.mulf %39, %40 : vector<64x32xf32>
    %42 = vector.shape_cast %41 : vector<64x32xf32> to vector<4x16x32xf32>
    %cst_22 = arith.constant dense<0.000000e+00> : vector<16x32xf32>
    %43 = vector.multi_reduction <add>, %42, %cst_22 [0] : vector<4x16x32xf32> to vector<16x32xf32>
    %c0_23 = arith.constant 0 : index
    %c0_24 = arith.constant 0 : index
    %44 = vector.load %arg9[%c0_23, %c0_24] : memref<32x32xf32, #tpu.memory_space<vmem>>, vector<32x32xf32>
    %cst_25 = arith.constant dense<0.000000e+00> : vector<16x32xf32>
    %45 = tpu.matmul %43, %44, %cst_25 {dimension_numbers = #tpu.dot_dimension_numbers<[1], [0], [0], [1], [0, 0, 1, 1], [], []>} : vector<16x32xf32>, vector<32x32xf32>, vector<16x32xf32> -> vector<16x32xf32>
    %46 = arith.addf %13, %45 : vector<16x32xf32>
    %c0_26 = arith.constant 0 : index
    %c0_27 = arith.constant 0 : index
    %47 = vector.load %arg10[%c0_26, %c0_27] : memref<1x32xf32, #tpu.memory_space<vmem>>, vector<1x32xf32>
    %48 = vector.broadcast %47 : vector<1x32xf32> to vector<16x32xf32>
    %49 = arith.addf %46, %48 : vector<16x32xf32>
    %cst_28 = arith.constant dense<0.000000e+00> : vector<16xf32>
    %50 = vector.multi_reduction <add>, %49, %cst_28 [1] : vector<16x32xf32> to vector<16xf32>
    %51 = vector.shape_cast %50 : vector<16xf32> to vector<16x1xf32>
    %cst_29 = arith.constant 3.200000e+01 : f32
    %52 = vector.broadcast %cst_29 : f32 to vector<16x1xf32>
    %53 = arith.divf %51, %52 : vector<16x1xf32>
    %54 = vector.broadcast %53 : vector<16x1xf32> to vector<16x32xf32>
    %55 = arith.subf %49, %54 : vector<16x32xf32>
    %56 = arith.mulf %55, %55 : vector<16x32xf32>
    %cst_30 = arith.constant dense<0.000000e+00> : vector<16xf32>
    %57 = vector.multi_reduction <add>, %56, %cst_30 [1] : vector<16x32xf32> to vector<16xf32>
    %58 = vector.shape_cast %57 : vector<16xf32> to vector<16x1xf32>
    %cst_31 = arith.constant 3.200000e+01 : f32
    %59 = vector.broadcast %cst_31 : f32 to vector<16x1xf32>
    %60 = arith.divf %58, %59 : vector<16x1xf32>
    %61 = vector.broadcast %53 : vector<16x1xf32> to vector<16x32xf32>
    %62 = arith.subf %49, %61 : vector<16x32xf32>
    %cst_32 = arith.constant 9.99999974E-6 : f32
    %63 = vector.broadcast %cst_32 : f32 to vector<16x1xf32>
    %64 = arith.addf %60, %63 : vector<16x1xf32>
    %65 = math.rsqrt %64 : vector<16x1xf32>
    %66 = vector.broadcast %65 : vector<16x1xf32> to vector<16x32xf32>
    %67 = arith.mulf %62, %66 : vector<16x32xf32>
    %c0_33 = arith.constant 0 : index
    %c0_34 = arith.constant 0 : index
    %68 = vector.load %arg11[%c0_33, %c0_34] : memref<1x32xf32, #tpu.memory_space<vmem>>, vector<1x32xf32>
    %69 = vector.broadcast %68 : vector<1x32xf32> to vector<16x32xf32>
    %70 = arith.mulf %67, %69 : vector<16x32xf32>
    %c0_35 = arith.constant 0 : index
    %c0_36 = arith.constant 0 : index
    %71 = vector.load %arg12[%c0_35, %c0_36] : memref<1x32xf32, #tpu.memory_space<vmem>>, vector<1x32xf32>
    %72 = vector.broadcast %71 : vector<1x32xf32> to vector<16x32xf32>
    %73 = arith.addf %70, %72 : vector<16x32xf32>
    %cst_37 = arith.constant 0.000000e+00 : f32
    %74 = vector.broadcast %cst_37 : f32 to vector<16x32xf32>
    %75 = arith.maximumf %73, %74 : vector<16x32xf32>
    %c0_38 = arith.constant 0 : index
    %c0_39 = arith.constant 0 : index
    %76 = vector.load %arg13[%c0_38, %c0_39] : memref<32x128xf32, #tpu.memory_space<vmem>>, vector<32x128xf32>
    %cst_40 = arith.constant dense<0.000000e+00> : vector<16x128xf32>
    %77 = tpu.matmul %75, %76, %cst_40 {dimension_numbers = #tpu.dot_dimension_numbers<[1], [0], [0], [1], [0, 0, 1, 1], [], []>} : vector<16x32xf32>, vector<32x128xf32>, vector<16x128xf32> -> vector<16x128xf32>
    %c0_41 = arith.constant 0 : index
    %c0_42 = arith.constant 0 : index
    %78 = vector.load %arg14[%c0_41, %c0_42] : memref<1x128xf32, #tpu.memory_space<vmem>>, vector<1x128xf32>
    %79 = vector.broadcast %78 : vector<1x128xf32> to vector<16x128xf32>
    %80 = arith.addf %77, %79 : vector<16x128xf32>
    %cst_43 = arith.constant 0.000000e+00 : f32
    %81 = vector.broadcast %cst_43 : f32 to vector<16x128xf32>
    %82 = arith.maximumf %80, %81 : vector<16x128xf32>
    %c0_44 = arith.constant 0 : index
    %c0_45 = arith.constant 0 : index
    %83 = vector.load %arg15[%c0_44, %c0_45] : memref<128x384xf32, #tpu.memory_space<vmem>>, vector<128x384xf32>
    %cst_46 = arith.constant dense<0.000000e+00> : vector<16x384xf32>
    %84 = tpu.matmul %82, %83, %cst_46 {dimension_numbers = #tpu.dot_dimension_numbers<[1], [0], [0], [1], [0, 0, 1, 1], [], []>} : vector<16x128xf32>, vector<128x384xf32>, vector<16x384xf32> -> vector<16x384xf32>
    %c0_47 = arith.constant 0 : index
    %c0_48 = arith.constant 0 : index
    %85 = vector.load %arg16[%c0_47, %c0_48] : memref<1x384xf32, #tpu.memory_space<vmem>>, vector<1x384xf32>
    %86 = vector.broadcast %85 : vector<1x384xf32> to vector<16x384xf32>
    %87 = arith.addf %84, %86 : vector<16x384xf32>
    %88 = vector.extract_strided_slice %87 {offsets = [0, 0], sizes = [16, 128], strides = [1, 1]} : vector<16x384xf32> to vector<16x128xf32>
    %89 = vector.extract_strided_slice %87 {offsets = [0, 128], sizes = [16, 128], strides = [1, 1]} : vector<16x384xf32> to vector<16x128xf32>
    %90 = vector.extract_strided_slice %87 {offsets = [0, 256], sizes = [16, 128], strides = [1, 1]} : vector<16x384xf32> to vector<16x128xf32>
    %91 = vector.shape_cast %88 : vector<16x128xf32> to vector<1x16x128xf32>
    %92 = vector.shape_cast %91 : vector<1x16x128xf32> to vector<1x16x128xf32>
    %93 = vector.broadcast %92 : vector<1x16x128xf32> to vector<4x16x128xf32>
    %94 = vector.shape_cast %93 : vector<4x16x128xf32> to vector<64x128xf32>
    %c0_49 = arith.constant 0 : index
    %c0_50 = arith.constant 0 : index
    %95 = vector.load %arg4[%c0_49, %c0_50] : memref<64x128xf32, #tpu.memory_space<vmem>>, vector<64x128xf32>
    %96 = arith.mulf %94, %95 : vector<64x128xf32>
    "tpu.trace_start"() <{level = 10 : i32, message = "re,ke->rk"}> : () -> ()
    %cst_51 = arith.constant dense<0.000000e+00> : vector<64x16xf32>
    %97 = tpu.matmul %96, %89, %cst_51 {dimension_numbers = #tpu.dot_dimension_numbers<[1], [1], [0], [0], [0, 0, 1, 0], [], []>} : vector<64x128xf32>, vector<16x128xf32>, vector<64x16xf32> -> vector<64x16xf32>
    "tpu.trace_stop"() : () -> ()
    %98 = arith.addf %97, %5 : vector<64x16xf32>
    %cst_52 = arith.constant dense<0xFF800000> : vector<64xf32>
    %99 = vector.multi_reduction <maximumf>, %98, %cst_52 [1] : vector<64x16xf32> to vector<64xf32>
    %100 = vector.shape_cast %99 : vector<64xf32> to vector<64x1xf32>
    %101 = vector.broadcast %100 : vector<64x1xf32> to vector<64x16xf32>
    %102 = arith.subf %98, %101 : vector<64x16xf32>
    %103 = math.exp %102 : vector<64x16xf32>
    %cst_53 = arith.constant dense<0.000000e+00> : vector<64xf32>
    %104 = vector.multi_reduction <add>, %103, %cst_53 [1] : vector<64x16xf32> to vector<64xf32>
    %105 = vector.shape_cast %104 : vector<64xf32> to vector<64x1xf32>
    %106 = vector.broadcast %105 : vector<64x1xf32> to vector<64x16xf32>
    %107 = arith.divf %103, %106 : vector<64x16xf32>
    %cst_54 = arith.constant dense<0.000000e+00> : vector<64x128xf32>
    %108 = tpu.matmul %107, %90, %cst_54 {dimension_numbers = #tpu.dot_dimension_numbers<[1], [0], [0], [1], [0, 0, 1, 1], [], []>} : vector<64x16xf32>, vector<16x128xf32>, vector<64x128xf32> -> vector<64x128xf32>
    %c0_55 = arith.constant 0 : index
    %c0_56 = arith.constant 0 : index
    %109 = vector.load %arg4[%c0_55, %c0_56] : memref<64x128xf32, #tpu.memory_space<vmem>>, vector<64x128xf32>
    %110 = arith.mulf %108, %109 : vector<64x128xf32>
    %111 = vector.shape_cast %110 : vector<64x128xf32> to vector<4x16x128xf32>
    %cst_57 = arith.constant dense<0.000000e+00> : vector<16x128xf32>
    %112 = vector.multi_reduction <add>, %111, %cst_57 [0] : vector<4x16x128xf32> to vector<16x128xf32>
    %c0_58 = arith.constant 0 : index
    %c0_59 = arith.constant 0 : index
    %113 = vector.load %arg17[%c0_58, %c0_59] : memref<128x128xf32, #tpu.memory_space<vmem>>, vector<128x128xf32>
    %cst_60 = arith.constant dense<0.000000e+00> : vector<16x128xf32>
    %114 = tpu.matmul %112, %113, %cst_60 {dimension_numbers = #tpu.dot_dimension_numbers<[1], [0], [0], [1], [0, 0, 1, 1], [], []>} : vector<16x128xf32>, vector<128x128xf32>, vector<16x128xf32> -> vector<16x128xf32>
    %115 = arith.addf %82, %114 : vector<16x128xf32>
    %c0_61 = arith.constant 0 : index
    %c0_62 = arith.constant 0 : index
    %116 = vector.load %arg18[%c0_61, %c0_62] : memref<1x128xf32, #tpu.memory_space<vmem>>, vector<1x128xf32>
    %117 = vector.broadcast %116 : vector<1x128xf32> to vector<16x128xf32>
    %118 = arith.addf %115, %117 : vector<16x128xf32>
    %cst_63 = arith.constant dense<0.000000e+00> : vector<16xf32>
    %119 = vector.multi_reduction <add>, %118, %cst_63 [1] : vector<16x128xf32> to vector<16xf32>
    %120 = vector.shape_cast %119 : vector<16xf32> to vector<16x1xf32>
    %cst_64 = arith.constant 1.280000e+02 : f32
    %121 = vector.broadcast %cst_64 : f32 to vector<16x1xf32>
    %122 = arith.divf %120, %121 : vector<16x1xf32>
    %123 = vector.broadcast %122 : vector<16x1xf32> to vector<16x128xf32>
    %124 = arith.subf %118, %123 : vector<16x128xf32>
    %125 = arith.mulf %124, %124 : vector<16x128xf32>
    %cst_65 = arith.constant dense<0.000000e+00> : vector<16xf32>
    %126 = vector.multi_reduction <add>, %125, %cst_65 [1] : vector<16x128xf32> to vector<16xf32>
    %127 = vector.shape_cast %126 : vector<16xf32> to vector<16x1xf32>
    %cst_66 = arith.constant 1.280000e+02 : f32
    %128 = vector.broadcast %cst_66 : f32 to vector<16x1xf32>
    %129 = arith.divf %127, %128 : vector<16x1xf32>
    %130 = vector.broadcast %122 : vector<16x1xf32> to vector<16x128xf32>
    %131 = arith.subf %118, %130 : vector<16x128xf32>
    %cst_67 = arith.constant 9.99999974E-6 : f32
    %132 = vector.broadcast %cst_67 : f32 to vector<16x1xf32>
    %133 = arith.addf %129, %132 : vector<16x1xf32>
    %134 = math.rsqrt %133 : vector<16x1xf32>
    %135 = vector.broadcast %134 : vector<16x1xf32> to vector<16x128xf32>
    %136 = arith.mulf %131, %135 : vector<16x128xf32>
    %c0_68 = arith.constant 0 : index
    %c0_69 = arith.constant 0 : index
    %137 = vector.load %arg19[%c0_68, %c0_69] : memref<1x128xf32, #tpu.memory_space<vmem>>, vector<1x128xf32>
    %138 = vector.broadcast %137 : vector<1x128xf32> to vector<16x128xf32>
    %139 = arith.mulf %136, %138 : vector<16x128xf32>
    %c0_70 = arith.constant 0 : index
    %c0_71 = arith.constant 0 : index
    %140 = vector.load %arg20[%c0_70, %c0_71] : memref<1x128xf32, #tpu.memory_space<vmem>>, vector<1x128xf32>
    %141 = vector.broadcast %140 : vector<1x128xf32> to vector<16x128xf32>
    %142 = arith.addf %139, %141 : vector<16x128xf32>
    %cst_72 = arith.constant 0.000000e+00 : f32
    %143 = vector.broadcast %cst_72 : f32 to vector<16x128xf32>
    %144 = arith.maximumf %142, %143 : vector<16x128xf32>
    %c0_73 = arith.constant 0 : index
    %c0_74 = arith.constant 0 : index
    %145 = vector.load %arg21[%c0_73, %c0_74] : memref<16x128xf32, #tpu.memory_space<vmem>>, vector<16x128xf32>
    tpu.vector_store %arg21[%c0_73, %c0_74], %144 {strides = array<i32>} : memref<16x128xf32, #tpu.memory_space<vmem>>, vector<16x128xf32>,
    return
  }
  func.func @transform_0(%arg0: i32) -> (i32, i32) {
    %c0_i32 = arith.constant 0 : i32
    %c0_i32_0 = arith.constant 0 : i32
    return %arg0, %c0_i32 : i32, i32
  }
  func.func @transform_1(%arg0: i32) -> (i32, i32, i32) {
    %c0_i32 = arith.constant 0 : i32
    %c0_i32_0 = arith.constant 0 : i32
    %c0_i32_1 = arith.constant 0 : i32
    return %arg0, %c0_i32, %c0_i32_0 : i32, i32, i32
  }
  func.func @transform_2(%arg0: i32) -> (i32, i32) {
    %c0_i32 = arith.constant 0 : i32
    %c0_i32_0 = arith.constant 0 : i32
    %c0_i32_1 = arith.constant 0 : i32
    return %c0_i32, %c0_i32_0 : i32, i32
  }
  func.func @transform_3(%arg0: i32) -> (i32, i32) {
    %c0_i32 = arith.constant 0 : i32
    %c0_i32_0 = arith.constant 0 : i32
    %c0_i32_1 = arith.constant 0 : i32
    return %c0_i32, %c0_i32_0 : i32, i32
  }
  func.func @transform_4(%arg0: i32) -> (i32, i32) {
    %c0_i32 = arith.constant 0 : i32
    %c0_i32_0 = arith.constant 0 : i32
    %c0_i32_1 = arith.constant 0 : i32
    return %c0_i32, %c0_i32_0 : i32, i32
  }
  func.func @transform_5(%arg0: i32) -> (i32, i32) {
    %c0_i32 = arith.constant 0 : i32
    %c0_i32_0 = arith.constant 0 : i32
    %c0_i32_1 = arith.constant 0 : i32
    return %c0_i32, %c0_i32_0 : i32, i32
  }
  func.func @transform_6(%arg0: i32) -> (i32, i32) {
    %c0_i32 = arith.constant 0 : i32
    %c0_i32_0 = arith.constant 0 : i32
    %c0_i32_1 = arith.constant 0 : i32
    return %c0_i32, %c0_i32_0 : i32, i32
  }
  func.func @transform_7(%arg0: i32) -> (i32, i32) {
    %c0_i32 = arith.constant 0 : i32
    %c0_i32_0 = arith.constant 0 : i32
    %c0_i32_1 = arith.constant 0 : i32
    return %c0_i32, %c0_i32_0 : i32, i32
  }
  func.func @transform_8(%arg0: i32) -> (i32, i32) {
    %c0_i32 = arith.constant 0 : i32
    %c0_i32_0 = arith.constant 0 : i32
    %c0_i32_1 = arith.constant 0 : i32
    return %c0_i32, %c0_i32_0 : i32, i32
  }
  func.func @transform_9(%arg0: i32) -> (i32, i32) {
    %c0_i32 = arith.constant 0 : i32
    %c0_i32_0 = arith.constant 0 : i32
    %c0_i32_1 = arith.constant 0 : i32
    return %c0_i32, %c0_i32_0 : i32, i32
  }
  func.func @transform_10(%arg0: i32) -> (i32, i32) {
    %c0_i32 = arith.constant 0 : i32
    %c0_i32_0 = arith.constant 0 : i32
    %c0_i32_1 = arith.constant 0 : i32
    return %c0_i32, %c0_i32_0 : i32, i32
  }
  func.func @transform_11(%arg0: i32) -> (i32, i32) {
    %c0_i32 = arith.constant 0 : i32
    %c0_i32_0 = arith.constant 0 : i32
    %c0_i32_1 = arith.constant 0 : i32
    return %c0_i32, %c0_i32_0 : i32, i32
  }
  func.func @transform_12(%arg0: i32) -> (i32, i32) {
    %c0_i32 = arith.constant 0 : i32
    %c0_i32_0 = arith.constant 0 : i32
    %c0_i32_1 = arith.constant 0 : i32
    return %c0_i32, %c0_i32_0 : i32, i32
  }
  func.func @transform_13(%arg0: i32) -> (i32, i32) {
    %c0_i32 = arith.constant 0 : i32
    %c0_i32_0 = arith.constant 0 : i32
    %c0_i32_1 = arith.constant 0 : i32
    return %c0_i32, %c0_i32_0 : i32, i32
  }
  func.func @transform_14(%arg0: i32) -> (i32, i32) {
    %c0_i32 = arith.constant 0 : i32
    %c0_i32_0 = arith.constant 0 : i32
    %c0_i32_1 = arith.constant 0 : i32
    return %c0_i32, %c0_i32_0 : i32, i32
  }
  func.func @transform_15(%arg0: i32) -> (i32, i32) {
    %c0_i32 = arith.constant 0 : i32
    %c0_i32_0 = arith.constant 0 : i32
    %c0_i32_1 = arith.constant 0 : i32
    return %c0_i32, %c0_i32_0 : i32, i32
  }
  func.func @transform_16(%arg0: i32) -> (i32, i32) {
    %c0_i32 = arith.constant 0 : i32
    %c0_i32_0 = arith.constant 0 : i32
    %c0_i32_1 = arith.constant 0 : i32
    return %c0_i32, %c0_i32_0 : i32, i32
  }
  func.func @transform_17(%arg0: i32) -> (i32, i32) {
    %c0_i32 = arith.constant 0 : i32
    %c0_i32_0 = arith.constant 0 : i32
    %c0_i32_1 = arith.constant 0 : i32
    return %c0_i32, %c0_i32_0 : i32, i32
  }
  func.func @transform_18(%arg0: i32) -> (i32, i32) {
    %c0_i32 = arith.constant 0 : i32
    %c0_i32_0 = arith.constant 0 : i32
    %c0_i32_1 = arith.constant 0 : i32
    return %c0_i32, %c0_i32_0 : i32, i32
  }
  func.func @transform_19(%arg0: i32) -> (i32, i32) {
    %c0_i32 = arith.constant 0 : i32
    %c0_i32_0 = arith.constant 0 : i32
    %c0_i32_1 = arith.constant 0 : i32
    return %c0_i32, %c0_i32_0 : i32, i32
  }
  func.func @transform_20(%arg0: i32) -> (i32, i32) {
    %c0_i32 = arith.constant 0 : i32
    %c0_i32_0 = arith.constant 0 : i32
    return %arg0, %c0_i32 : i32, i32
  }
}

</mosaic_0001>

<llo_original>
// kernel: map_subnet_forward.1
$region0: #{map_subnet_forward.1}
  #allocation0 [shape = 'u32[]', space=smem, size = 0x4, offset = 0x4, fixed_abs, tag = 'smem constant byte address 0x4 - core index']
  #allocation1 [shape = 'u32[144,128]{1,0:T(1,128)}', space=vmem, size = 0x12000, scoped, tag = 'internal scratch']
  %s0 = inlined_call_operand.vmem [shape: f32[16,128], index: 0, kind: input, shape index: {}]
  %s1 = inlined_call_operand.vmem [shape: f32[1,16,16], index: 1, kind: input, shape index: {}]
  %s2 = inlined_call_operand.vmem [shape: f32[64,32], index: 2, kind: input, shape index: {}]
  %s3 = inlined_call_operand.vmem [shape: f32[64,128], index: 3, kind: input, shape index: {}]
  %s4 = inlined_call_operand.vmem [shape: f32[128,32], index: 4, kind: input, shape index: {}]
  %s5 = inlined_call_operand.vmem [shape: f32[1,32], index: 5, kind: input, shape index: {}]
  %s6 = inlined_call_operand.vmem [shape: f32[32,96], index: 6, kind: input, shape index: {}]
  %s7 = inlined_call_operand.vmem [shape: f32[1,96], index: 7, kind: input, shape index: {}]
  %s8 = inlined_call_operand.vmem [shape: f32[32,32], index: 8, kind: input, shape index: {}]
  %s9 = inlined_call_operand.vmem [shape: f32[1,32], index: 9, kind: input, shape index: {}]
  %s10 = inlined_call_operand.vmem [shape: f32[1,32], index: 10, kind: input, shape index: {}]
  %s11 = inlined_call_operand.vmem [shape: f32[1,32], index: 11, kind: input, shape index: {}]
  %s12 = inlined_call_operand.vmem [shape: f32[32,128], index: 12, kind: input, shape index: {}]
  %s13 = inlined_call_operand.vmem [shape: f32[1,128], index: 13, kind: input, shape index: {}]
  %s14 = inlined_call_operand.vmem [shape: f32[128,384], index: 14, kind: input, shape index: {}]
  %s15 = inlined_call_operand.vmem [shape: f32[1,384], index: 15, kind: input, shape index: {}]
  %s16 = inlined_call_operand.vmem [shape: f32[128,128], index: 16, kind: input, shape index: {}]
  %s17 = inlined_call_operand.vmem [shape: f32[1,128], index: 17, kind: input, shape index: {}]
  %s18 = inlined_call_operand.vmem [shape: f32[1,128], index: 18, kind: input, shape index: {}]
  %s19 = inlined_call_operand.vmem [shape: f32[1,128], index: 19, kind: input, shape index: {}]
  %s20 = inlined_call_operand.vmem [shape: f32[16,128], index: 20, kind: output, shape index: {}]
  %s21 = sld [smem:[#allocation0]]
  $region90: #{map_subnet_forward.1} parent=0
    _
  %s23 = ssub.s32 1, %s21
  %s24 = scalar_select 0, %s23, %s21
  // Predicated region
  $region2: #{map_subnet_forward.1} parent=0 // pred_check
    _
  $region3: #{map_subnet_forward.1} parent=0 // pred_check_branch
    %26 = sbr.rel (0) target = $region5
  $region4: #{map_subnet_forward.1} parent=0 // pred_region
    _
  $region5: #{map_subnet_forward.1} parent=0 // pred_fallthru
    _
  // Predicated region
  $region6: #{map_subnet_forward.1} parent=0 // pred_check
    _
  $region7: #{map_subnet_forward.1} parent=0 // pred_check_branch
    %28 = sbr.rel (0) target = $region9
  $region8: #{map_subnet_forward.1} parent=0 // pred_region
    _
  $region9: #{map_subnet_forward.1} parent=0 // pred_fallthru
    _
  // Predicated region
  $region10: #{map_subnet_forward.1} parent=0 // pred_check
    _
  $region11: #{map_subnet_forward.1} parent=0 // pred_check_branch
    %30 = sbr.rel (0) target = $region13
  $region12: #{map_subnet_forward.1} parent=0 // pred_region
    _
  $region13: #{map_subnet_forward.1} parent=0 // pred_fallthru
    _
  // Predicated region
  $region14: #{map_subnet_forward.1} parent=0 // pred_check
    _
  $region15: #{map_subnet_forward.1} parent=0 // pred_check_branch
    %32 = sbr.rel (0) target = $region17
  $region16: #{map_subnet_forward.1} parent=0 // pred_region
    _
  $region17: #{map_subnet_forward.1} parent=0 // pred_fallthru
    _
  // Predicated region
  $region18: #{map_subnet_forward.1} parent=0 // pred_check
    _
  $region19: #{map_subnet_forward.1} parent=0 // pred_check_branch
    %34 = sbr.rel (0) target = $region21
  $region20: #{map_subnet_forward.1} parent=0 // pred_region
    _
  $region21: #{map_subnet_forward.1} parent=0 // pred_fallthru
    _
  // Predicated region
  $region22: #{map_subnet_forward.1} parent=0 // pred_check
    _
  $region23: #{map_subnet_forward.1} parent=0 // pred_check_branch
    %36 = sbr.rel (0) target = $region25
  $region24: #{map_subnet_forward.1} parent=0 // pred_region
    _
  $region25: #{map_subnet_forward.1} parent=0 // pred_fallthru
    _
  // Predicated region
  $region26: #{map_subnet_forward.1} parent=0 // pred_check
    _
  $region27: #{map_subnet_forward.1} parent=0 // pred_check_branch
    %38 = sbr.rel (0) target = $region29
  $region28: #{map_subnet_forward.1} parent=0 // pred_region
    _
  $region29: #{map_subnet_forward.1} parent=0 // pred_fallthru
    _
  // Predicated region
  $region30: #{map_subnet_forward.1} parent=0 // pred_check
    _
  $region31: #{map_subnet_forward.1} parent=0 // pred_check_branch
    %40 = sbr.rel (0) target = $region33
  $region32: #{map_subnet_forward.1} parent=0 // pred_region
    _
  $region33: #{map_subnet_forward.1} parent=0 // pred_fallthru
    _
  // Predicated region
  $region34: #{map_subnet_forward.1} parent=0 // pred_check
    _
  $region35: #{map_subnet_forward.1} parent=0 // pred_check_branch
    %42 = sbr.rel (0) target = $region37
  $region36: #{map_subnet_forward.1} parent=0 // pred_region
    _
  $region37: #{map_subnet_forward.1} parent=0 // pred_fallthru
    _
  // Predicated region
  $region38: #{map_subnet_forward.1} parent=0 // pred_check
    _
  $region39: #{map_subnet_forward.1} parent=0 // pred_check_branch
    %44 = sbr.rel (0) target = $region41
  $region40: #{map_subnet_forward.1} parent=0 // pred_region
    _
  $region41: #{map_subnet_forward.1} parent=0 // pred_fallthru
    _
  // Predicated region
  $region42: #{map_subnet_forward.1} parent=0 // pred_check
    _
  $region43: #{map_subnet_forward.1} parent=0 // pred_check_branch
    %46 = sbr.rel (0) target = $region45
  $region44: #{map_subnet_forward.1} parent=0 // pred_region
    _
  $region45: #{map_subnet_forward.1} parent=0 // pred_fallthru
    _
  // Predicated region
  $region46: #{map_subnet_forward.1} parent=0 // pred_check
    _
  $region47: #{map_subnet_forward.1} parent=0 // pred_check_branch
    %48 = sbr.rel (0) target = $region49
  $region48: #{map_subnet_forward.1} parent=0 // pred_region
    _
  $region49: #{map_subnet_forward.1} parent=0 // pred_fallthru
    _
  // Predicated region
  $region50: #{map_subnet_forward.1} parent=0 // pred_check
    _
  $region51: #{map_subnet_forward.1} parent=0 // pred_check_branch
    %50 = sbr.rel (0) target = $region53
  $region52: #{map_subnet_forward.1} parent=0 // pred_region
    _
  $region53: #{map_subnet_forward.1} parent=0 // pred_fallthru
    _
  // Predicated region
  $region54: #{map_subnet_forward.1} parent=0 // pred_check
    _
  $region55: #{map_subnet_forward.1} parent=0 // pred_check_branch
    %52 = sbr.rel (0) target = $region57
  $region56: #{map_subnet_forward.1} parent=0 // pred_region
    _
  $region57: #{map_subnet_forward.1} parent=0 // pred_fallthru
    _
  // Predicated region
  $region58: #{map_subnet_forward.1} parent=0 // pred_check
    _
  $region59: #{map_subnet_forward.1} parent=0 // pred_check_branch
    %54 = sbr.rel (0) target = $region61
  $region60: #{map_subnet_forward.1} parent=0 // pred_region
    _
  $region61: #{map_subnet_forward.1} parent=0 // pred_fallthru
    _
  // Predicated region
  $region62: #{map_subnet_forward.1} parent=0 // pred_check
    _
  $region63: #{map_subnet_forward.1} parent=0 // pred_check_branch
    %56 = sbr.rel (0) target = $region65
  $region64: #{map_subnet_forward.1} parent=0 // pred_region
    _
  $region65: #{map_subnet_forward.1} parent=0 // pred_fallthru
    _
  // Predicated region
  $region66: #{map_subnet_forward.1} parent=0 // pred_check
    _
  $region67: #{map_subnet_forward.1} parent=0 // pred_check_branch
    %58 = sbr.rel (0) target = $region69
  $region68: #{map_subnet_forward.1} parent=0 // pred_region
    _
  $region69: #{map_subnet_forward.1} parent=0 // pred_fallthru
    _
  // Predicated region
  $region70: #{map_subnet_forward.1} parent=0 // pred_check
    _
  $region71: #{map_subnet_forward.1} parent=0 // pred_check_branch
    %60 = sbr.rel (0) target = $region73
  $region72: #{map_subnet_forward.1} parent=0 // pred_region
    _
  $region73: #{map_subnet_forward.1} parent=0 // pred_fallthru
    _
  // Predicated region
  $region74: #{map_subnet_forward.1} parent=0 // pred_check
    _
  $region75: #{map_subnet_forward.1} parent=0 // pred_check_branch
    %62 = sbr.rel (0) target = $region77
  $region76: #{map_subnet_forward.1} parent=0 // pred_region
    _
  $region77: #{map_subnet_forward.1} parent=0 // pred_fallthru
    _
  // Predicated region
  $region78: #{map_subnet_forward.1} parent=0 // pred_check
    _
  $region79: #{map_subnet_forward.1} parent=0 // pred_check_branch
    %64 = sbr.rel (0) target = $region81
  $region80: #{map_subnet_forward.1} parent=0 // pred_region
    _
  $region81: #{map_subnet_forward.1} parent=0 // pred_fallthru
    _
  %v65 = vld [vmem:[%s1] sm:$0xff]
  %v66 = vld [vmem:[%s1 + $0x8] sm:$0xff]
  %v67 = vld [vmem:[%s0] sm:$0xff]
  %v68 = vld [vmem:[%s0 + $0x8] sm:$0xff]
  %v69 = vld [vmem:[%s4] sm:$0xff]
  %v70 = vld [vmem:[%s4 + $0x8] sm:$0xff]
  %v71 = vld [vmem:[%s4 + $0x10] sm:$0xff]
  %v72 = vld [vmem:[%s4 + $0x18] sm:$0xff]
  %v73 = vld [vmem:[%s4 + $0x20] sm:$0xff]
  %v74 = vld [vmem:[%s4 + $0x28] sm:$0xff]
  %v75 = vld [vmem:[%s4 + $0x30] sm:$0xff]
  %v76 = vld [vmem:[%s4 + $0x38] sm:$0xff]
  %v77 = vld [vmem:[%s4 + $0x40] sm:$0xff]
  %v78 = vld [vmem:[%s4 + $0x48] sm:$0xff]
  %v79 = vld [vmem:[%s4 + $0x50] sm:$0xff]
  %v80 = vld [vmem:[%s4 + $0x58] sm:$0xff]
  %v81 = vld [vmem:[%s4 + $0x60] sm:$0xff]
  %v82 = vld [vmem:[%s4 + $0x68] sm:$0xff]
  %v83 = vld [vmem:[%s4 + $0x70] sm:$0xff]
  %v84 = vld [vmem:[%s4 + $0x78] sm:$0xff]
  %v85 = vld [vmem:[%s5] sm:$0x1]
  %v87 = vlaneseq
  %v88 = vshrl.u32 %v87, 7
  %v89 = vsub.s32 0, %v88
  %v90 = vrot.slane %v85, %v89
  %92 = vmatprep.subr.mxu0 0.0
  %93 = vmatpush1.msra.mxu0 %v69
  %94 = vmatprep.subr.mxu0 0.0
  %95 = vmatpush1.msra.mxu0 %v70
  %96 = vmatprep.subr.mxu0 0.0
  %97 = vmatpush1.msra.mxu0 %v71
  %98 = vmatprep.subr.mxu0 0.0
  %99 = vmatpush1.msra.mxu0 %v72
  %100 = vmatprep.subr.mxu0 0.0
  %101 = vmatpush1.msra.mxu0 %v73
  %102 = vmatprep.subr.mxu0 0.0
  %103 = vmatpush1.msra.mxu0 %v74
  %104 = vmatprep.subr.mxu0 0.0
  %105 = vmatpush1.msra.mxu0 %v75
  %106 = vmatprep.subr.mxu0 0.0
  %107 = vmatpush1.msra.mxu0 %v76
  %108 = vmatprep.subr.mxu0 0.0
  %109 = vmatpush1.msra.mxu0 %v77
  %110 = vmatprep.subr.mxu0 0.0
  %111 = vmatpush1.msra.mxu0 %v78
  %112 = vmatprep.subr.mxu0 0.0
  %113 = vmatpush1.msra.mxu0 %v79
  %114 = vmatprep.subr.mxu0 0.0
  %115 = vmatpush1.msra.mxu0 %v80
  %116 = vmatprep.subr.mxu0 0.0
  %117 = vmatpush1.msra.mxu0 %v81
  %118 = vmatprep.subr.mxu0 0.0
  %119 = vmatpush1.msra.mxu0 %v82
  %120 = vmatprep.subr.mxu0 0.0
  %121 = vmatpush1.msra.mxu0 %v83
  %122 = vmatprep.subr.mxu0 0.0
  %123 = vmatpush1.msra.mxu0 %v84
  %124 = vmatprep.subr.mxu0 0.0
  %125 = vmatpush1.msra.mxu0 0.0
  %126 = vmatprep.subr.mxu0 0.0
  %127 = vmatpush1.msra.mxu0 0.0
  %128 = vmatprep.subr.mxu0 0.0
  %129 = vmatpush1.msra.mxu0 0.0
  %130 = vmatprep.subr.mxu0 0.0
  %131 = vmatpush1.msra.mxu0 0.0
  %132 = vmatprep.subr.mxu0 0.0
  %133 = vmatpush1.msra.mxu0 0.0
  %134 = vmatprep.subr.mxu0 0.0
  %135 = vmatpush1.msra.mxu0 0.0
  %136 = vmatprep.subr.mxu0 0.0
  %137 = vmatpush1.msra.mxu0 0.0
  %138 = vmatprep.subr.mxu0 0.0
  %139 = vmatpush1.msra.mxu0 0.0
  %140 = vmatprep.subr.mxu0 0.0
  %141 = vmatpush1.msra.mxu0 0.0
  %142 = vmatprep.subr.mxu0 0.0
  %143 = vmatpush1.msra.mxu0 0.0
  %144 = vmatprep.subr.mxu0 0.0
  %145 = vmatpush1.msra.mxu0 0.0
  %146 = vmatprep.subr.mxu0 0.0
  %147 = vmatpush1.msra.mxu0 0.0
  %148 = vmatprep.subr.mxu0 0.0
  %149 = vmatpush1.msra.mxu0 0.0
  %150 = vmatprep.subr.mxu0 0.0
  %151 = vmatpush1.msra.mxu0 0.0
  %152 = vmatprep.subr.mxu0 0.0
  %153 = vmatpush1.msra.mxu0 0.0
  %154 = vmatprep.subr.mxu0 0.0
  %155 = vmatpush1.msra.mxu0 0.0
  %156 = vmatprep.mubr.f32.mxu0 0.0
  %157 = vmatmul.mubr.f32.gmra.mrb[0].mxu0 %v67
  %v158 = vpop.f32.mrb[0].mxu0
  %v159 = vadd.f32 %v90, %v158
  %v160 = vpop.f32.mrb[0].mxu0
  %161 = vmatprep.mubr.f32.mxu0 0.0
  %162 = vmatmul.mubr.f32.gmra.mrb[0].mxu0 %v68
  %v163 = vpop.f32.mrb[0].mxu0
  %v164 = vadd.f32 %v90, %v163
  %v165 = vpop.f32.mrb[0].mxu0
  %166 = vdwg.mxu0
  %v167 = vmax.f32 %v159, 0.0
  %v168 = vmax.f32 %v164, 0.0
  %v169 = vld [vmem:[%s6] sm:$0xff]
  %v170 = vld [vmem:[%s6 + $0x8] sm:$0xff]
  %v171 = vld [vmem:[%s6 + $0x10] sm:$0xff]
  %v172 = vld [vmem:[%s6 + $0x18] sm:$0xff]
  %v173 = vld [vmem:[%s7] sm:$0x1]
  %v175 = vlaneseq
  %v176 = vshrl.u32 %v175, 7
  %v177 = vsub.s32 0, %v176
  %v178 = vrot.slane %v173, %v177
  %vm180 = vcmask 261120
  %v182 = vsel %vm180, %v167, 0
  %v185 = vsel %vm180, %v168, 0
  %187 = vmatprep.subr.mxu0 0.0
  %188 = vmatpush1.msra.mxu0 %v169
  %189 = vmatprep.subr.mxu0 0.0
  %190 = vmatpush1.msra.mxu0 %v170
  %191 = vmatprep.subr.mxu0 0.0
  %192 = vmatpush1.msra.mxu0 %v171
  %193 = vmatprep.subr.mxu0 0.0
  %194 = vmatpush1.msra.mxu0 %v172
  %195 = vmatprep.subr.mxu0 0.0
  %196 = vmatpush1.msra.mxu0 0.0
  %197 = vmatprep.subr.mxu0 0.0
  %198 = vmatpush1.msra.mxu0 0.0
  %199 = vmatprep.subr.mxu0 0.0
  %200 = vmatpush1.msra.mxu0 0.0
  %201 = vmatprep.subr.mxu0 0.0
  %202 = vmatpush1.msra.mxu0 0.0
  %203 = vmatprep.subr.mxu0 0.0
  %204 = vmatpush1.msra.mxu0 0.0
  %205 = vmatprep.subr.mxu0 0.0
  %206 = vmatpush1.msra.mxu0 0.0
  %207 = vmatprep.subr.mxu0 0.0
  %208 = vmatpush1.msra.mxu0 0.0
  %209 = vmatprep.subr.mxu0 0.0
  %210 = vmatpush1.msra.mxu0 0.0
  %211 = vmatprep.subr.mxu0 0.0
  %212 = vmatpush1.msra.mxu0 0.0
  %213 = vmatprep.subr.mxu0 0.0
  %214 = vmatpush1.msra.mxu0 0.0
  %215 = vmatprep.subr.mxu0 0.0
  %216 = vmatpush1.msra.mxu0 0.0
  %217 = vmatprep.subr.mxu0 0.0
  %218 = vmatpush1.msra.mxu0 0.0
  %219 = vmatprep.subr.mxu0 0.0
  %220 = vmatpush1.msra.mxu0 0.0
  %221 = vmatprep.subr.mxu0 0.0
  %222 = vmatpush1.msra.mxu0 0.0
  %223 = vmatprep.subr.mxu0 0.0
  %224 = vmatpush1.msra.mxu0 0.0
  %225 = vmatprep.subr.mxu0 0.0
  %226 = vmatpush1.msra.mxu0 0.0
  %227 = vmatprep.subr.mxu0 0.0
  %228 = vmatpush1.msra.mxu0 0.0
  %229 = vmatprep.subr.mxu0 0.0
  %230 = vmatpush1.msra.mxu0 0.0
  %231 = vmatprep.subr.mxu0 0.0
  %232 = vmatpush1.msra.mxu0 0.0
  %233 = vmatprep.subr.mxu0 0.0
  %234 = vmatpush1.msra.mxu0 0.0
  %235 = vmatprep.subr.mxu0 0.0
  %236 = vmatpush1.msra.mxu0 0.0
  %237 = vmatprep.subr.mxu0 0.0
  %238 = vmatpush1.msra.mxu0 0.0
  %239 = vmatprep.subr.mxu0 0.0
  %240 = vmatpush1.msra.mxu0 0.0
  %241 = vmatprep.subr.mxu0 0.0
  %242 = vmatpush1.msra.mxu0 0.0
  %243 = vmatprep.subr.mxu0 0.0
  %244 = vmatpush1.msra.mxu0 0.0
  %245 = vmatprep.subr.mxu0 0.0
  %246 = vmatpush1.msra.mxu0 0.0
  %247 = vmatprep.subr.mxu0 0.0
  %248 = vmatpush1.msra.mxu0 0.0
  %249 = vmatprep.subr.mxu0 0.0
  %250 = vmatpush1.msra.mxu0 0.0
  %251 = vmatprep.mubr.f32.mxu0 0.0
  %252 = vmatmul.mubr.f32.gmra.mrb[0].mxu0 %v182
  %v253 = vpop.f32.mrb[0].mxu0
  %v254 = vadd.f32 %v178, %v253
  %v255 = vpop.f32.mrb[0].mxu0
  %256 = vmatprep.mubr.f32.mxu0 0.0
  %257 = vmatmul.mubr.f32.gmra.mrb[0].mxu0 %v185
  %v258 = vpop.f32.mrb[0].mxu0
  %v259 = vadd.f32 %v178, %v258
  %v260 = vpop.f32.mrb[0].mxu0
  %261 = vdwg.mxu0
  %v262 = vld [vmem:[%s2] sm:$0xff]
  %v263 = vld [vmem:[%s2 + $0x8] sm:$0xff]
  %v264 = vld [vmem:[%s2 + $0x10] sm:$0xff]
  %v265 = vld [vmem:[%s2 + $0x18] sm:$0xff]
  %v266 = vld [vmem:[%s2 + $0x20] sm:$0xff]
  %v267 = vld [vmem:[%s2 + $0x28] sm:$0xff]
  %v268 = vld [vmem:[%s2 + $0x30] sm:$0xff]
  %v269 = vld [vmem:[%s2 + $0x38] sm:$0xff]
  %v270 = vmul.f32 %v254, %v262
  %v271 = vmul.f32 %v259, %v263
  %v272 = vmul.f32 %v254, %v264
  %v273 = vmul.f32 %v259, %v265
  %v274 = vmul.f32 %v254, %v266
  %v275 = vmul.f32 %v259, %v267
  %v276 = vmul.f32 %v254, %v268
  %v277 = vmul.f32 %v259, %v269
  %280 = vrot.lane.b32.xlu0 %v254, 96
  %v281 = vpop.permute.xlu0 %280
  %282 = vrot.lane.b32.xlu0 %v259, 96
  %v283 = vpop.permute.xlu0 %282
  %v285 = vsel %vm180, %v270, 0
  %v288 = vsel %vm180, %v271, 0
  %v291 = vsel %vm180, %v272, 0
  %v294 = vsel %vm180, %v273, 0
  %v297 = vsel %vm180, %v274, 0
  %v300 = vsel %vm180, %v275, 0
  %v303 = vsel %vm180, %v276, 0
  %v306 = vsel %vm180, %v277, 0
  %v308 = vsel %vm180, %v281, 0
  %v310 = vsel %vm180, %v283, 0
  %312 = vmatprep.subr.mxu0 0.0
  %313 = vmatpush1.xpose.msra.mxu0 %v308
  %314 = vmatprep.subr.mxu0 0.0
  %315 = vmatpush1.xpose.msra.mxu0 %v310
  %316 = vmatprep.subr.mxu0 0.0
  %317 = vmatpush1.xpose.msra.mxu0 0.0
  %318 = vmatprep.subr.mxu0 0.0
  %319 = vmatpush1.xpose.msra.mxu0 0.0
  %320 = vmatprep.subr.mxu0 0.0
  %321 = vmatpush1.xpose.msra.mxu0 0.0
  %322 = vmatprep.subr.mxu0 0.0
  %323 = vmatpush1.xpose.msra.mxu0 0.0
  %324 = vmatprep.subr.mxu0 0.0
  %325 = vmatpush1.xpose.msra.mxu0 0.0
  %326 = vmatprep.subr.mxu0 0.0
  %327 = vmatpush1.xpose.msra.mxu0 0.0
  %328 = vmatprep.subr.mxu0 0.0
  %329 = vmatpush1.xpose.msra.mxu0 0.0
  %330 = vmatprep.subr.mxu0 0.0
  %331 = vmatpush1.xpose.msra.mxu0 0.0
  %332 = vmatprep.subr.mxu0 0.0
  %333 = vmatpush1.xpose.msra.mxu0 0.0
  %334 = vmatprep.subr.mxu0 0.0
  %335 = vmatpush1.xpose.msra.mxu0 0.0
  %336 = vmatprep.subr.mxu0 0.0
  %337 = vmatpush1.xpose.msra.mxu0 0.0
  %338 = vmatprep.subr.mxu0 0.0
  %339 = vmatpush1.xpose.msra.mxu0 0.0
  %340 = vmatprep.subr.mxu0 0.0
  %341 = vmatpush1.xpose.msra.mxu0 0.0
  %342 = vmatprep.subr.mxu0 0.0
  %343 = vmatpush1.xpose.msra.mxu0 0.0
  %344 = vmatprep.subr.mxu0 0.0
  %345 = vmatpush1.xpose.msra.mxu0 0.0
  %346 = vmatprep.subr.mxu0 0.0
  %347 = vmatpush1.xpose.msra.mxu0 0.0
  %348 = vmatprep.subr.mxu0 0.0
  %349 = vmatpush1.xpose.msra.mxu0 0.0
  %350 = vmatprep.subr.mxu0 0.0
  %351 = vmatpush1.xpose.msra.mxu0 0.0
  %352 = vmatprep.subr.mxu0 0.0
  %353 = vmatpush1.xpose.msra.mxu0 0.0
  %354 = vmatprep.subr.mxu0 0.0
  %355 = vmatpush1.xpose.msra.mxu0 0.0
  %356 = vmatprep.subr.mxu0 0.0
  %357 = vmatpush1.xpose.msra.mxu0 0.0
  %358 = vmatprep.subr.mxu0 0.0
  %359 = vmatpush1.xpose.msra.mxu0 0.0
  %360 = vmatprep.subr.mxu0 0.0
  %361 = vmatpush1.xpose.msra.mxu0 0.0
  %362 = vmatprep.subr.mxu0 0.0
  %363 = vmatpush1.xpose.msra.mxu0 0.0
  %364 = vmatprep.subr.mxu0 0.0
  %365 = vmatpush1.xpose.msra.mxu0 0.0
  %366 = vmatprep.subr.mxu0 0.0
  %367 = vmatpush1.xpose.msra.mxu0 0.0
  %368 = vmatprep.subr.mxu0 0.0
  %369 = vmatpush1.xpose.msra.mxu0 0.0
  %370 = vmatprep.subr.mxu0 0.0
  %371 = vmatpush1.xpose.msra.mxu0 0.0
  %372 = vmatprep.subr.mxu0 0.0
  %373 = vmatpush1.xpose.msra.mxu0 0.0
  %374 = vmatprep.subr.mxu0 0.0
  %375 = vmatpush1.xpose.msra.mxu0 0.0
  %376 = vmatprep.mubr.f32.mxu0 0.0
  %377 = vmatmul.mubr.f32.gmra.mrb[0].mxu0 %v285
  %v378 = vpop.f32.mrb[0].mxu0
  %v379 = vadd.f32 %v65, %v378
  %v380 = vpop.f32.mrb[0].mxu0
  %381 = vmatprep.mubr.f32.mxu0 0.0
  %382 = vmatmul.mubr.f32.gmra.mrb[0].mxu0 %v288
  %v383 = vpop.f32.mrb[0].mxu0
  %v384 = vadd.f32 %v66, %v383
  %v385 = vpop.f32.mrb[0].mxu0
  %386 = vmatprep.mubr.f32.mxu0 0.0
  %387 = vmatmul.mubr.f32.gmra.mrb[0].mxu0 %v291
  %v388 = vpop.f32.mrb[0].mxu0
  %v389 = vadd.f32 %v65, %v388
  %v390 = vpop.f32.mrb[0].mxu0
  %391 = vmatprep.mubr.f32.mxu0 0.0
  %392 = vmatmul.mubr.f32.gmra.mrb[0].mxu0 %v294
  %v393 = vpop.f32.mrb[0].mxu0
  %v394 = vadd.f32 %v66, %v393
  %v395 = vpop.f32.mrb[0].mxu0
  %396 = vmatprep.mubr.f32.mxu0 0.0
  %397 = vmatmul.mubr.f32.gmra.mrb[0].mxu0 %v297
  %v398 = vpop.f32.mrb[0].mxu0
  %v399 = vadd.f32 %v65, %v398
  %v400 = vpop.f32.mrb[0].mxu0
  %401 = vmatprep.mubr.f32.mxu0 0.0
  %402 = vmatmul.mubr.f32.gmra.mrb[0].mxu0 %v300
  %v403 = vpop.f32.mrb[0].mxu0
  %v404 = vadd.f32 %v66, %v403
  %v405 = vpop.f32.mrb[0].mxu0
  %406 = vmatprep.mubr.f32.mxu0 0.0
  %407 = vmatmul.mubr.f32.gmra.mrb[0].mxu0 %v303
  %v408 = vpop.f32.mrb[0].mxu0
  %v409 = vadd.f32 %v65, %v408
  %v410 = vpop.f32.mrb[0].mxu0
  %411 = vmatprep.mubr.f32.mxu0 0.0
  %412 = vmatmul.mubr.f32.gmra.mrb[0].mxu0 %v306
  %v413 = vpop.f32.mrb[0].mxu0
  %v414 = vadd.f32 %v66, %v413
  %v415 = vpop.f32.mrb[0].mxu0
  %416 = vdwg.mxu0
  %vm417 = vcmask 130048
  %v418 = vsel %vm417, %v379, -inf
  %419 = vmax.xlane.f32.xlu0 %v418
  %v420 = vpop.xlane.xlu0 %419
  %v421 = vsel %vm417, %v384, -inf
  %422 = vmax.xlane.f32.xlu0 %v421
  %v423 = vpop.xlane.xlu0 %422
  %v424 = vsel %vm417, %v389, -inf
  %425 = vmax.xlane.f32.xlu0 %v424
  %v426 = vpop.xlane.xlu0 %425
  %v427 = vsel %vm417, %v394, -inf
  %428 = vmax.xlane.f32.xlu0 %v427
  %v429 = vpop.xlane.xlu0 %428
  %v430 = vsel %vm417, %v399, -inf
  %431 = vmax.xlane.f32.xlu0 %v430
  %v432 = vpop.xlane.xlu0 %431
  %v433 = vsel %vm417, %v404, -inf
  %434 = vmax.xlane.f32.xlu0 %v433
  %v435 = vpop.xlane.xlu0 %434
  %v436 = vsel %vm417, %v409, -inf
  %437 = vmax.xlane.f32.xlu0 %v436
  %v438 = vpop.xlane.xlu0 %437
  %v439 = vsel %vm417, %v414, -inf
  %440 = vmax.xlane.f32.xlu0 %v439
  %v441 = vpop.xlane.xlu0 %440
  %v442 = vsub.f32 %v379, %v420
  %v443 = vsub.f32 %v384, %v423
  %v444 = vsub.f32 %v389, %v426
  %v445 = vsub.f32 %v394, %v429
  %v446 = vsub.f32 %v399, %v432
  %v447 = vsub.f32 %v404, %v435
  %v448 = vsub.f32 %v409, %v438
  %v449 = vsub.f32 %v414, %v441
  %v450 = vmul.f32 %v442, 1.442695
  %v451 = vpow.pop %v450
  %v452 = vmul.f32 %v443, 1.442695
  %v453 = vpow.pop %v452
  %v454 = vmul.f32 %v444, 1.442695
  %v455 = vpow.pop %v454
  %v456 = vmul.f32 %v445, 1.442695
  %v457 = vpow.pop %v456
  %v458 = vmul.f32 %v446, 1.442695
  %v459 = vpow.pop %v458
  %v460 = vmul.f32 %v447, 1.442695
  %v461 = vpow.pop %v460
  %v462 = vmul.f32 %v448, 1.442695
  %v463 = vpow.pop %v462
  %v464 = vmul.f32 %v449, 1.442695
  %v465 = vpow.pop %v464
  %v466 = vsel %vm417, %v451, 0.0
  %467 = vadd.xlane.f32.xlu0 %v466
  %v468 = vpop.xlane.xlu0 %467
  %v469 = vsel %vm417, %v453, 0.0
  %470 = vadd.xlane.f32.xlu0 %v469
  %v471 = vpop.xlane.xlu0 %470
  %v472 = vsel %vm417, %v455, 0.0
  %473 = vadd.xlane.f32.xlu0 %v472
  %v474 = vpop.xlane.xlu0 %473
  %v475 = vsel %vm417, %v457, 0.0
  %476 = vadd.xlane.f32.xlu0 %v475
  %v477 = vpop.xlane.xlu0 %476
  %v478 = vsel %vm417, %v459, 0.0
  %479 = vadd.xlane.f32.xlu0 %v478
  %v480 = vpop.xlane.xlu0 %479
  %v481 = vsel %vm417, %v461, 0.0
  %482 = vadd.xlane.f32.xlu0 %v481
  %v483 = vpop.xlane.xlu0 %482
  %v484 = vsel %vm417, %v463, 0.0
  %485 = vadd.xlane.f32.xlu0 %v484
  %v486 = vpop.xlane.xlu0 %485
  %v487 = vsel %vm417, %v465, 0.0
  %488 = vadd.xlane.f32.xlu0 %v487
  %v489 = vpop.xlane.xlu0 %488
  %v490 = vrcp.pop %v468
  %v491 = vmul.f32 %v451, %v490
  %v492 = vrcp.pop %v471
  %v493 = vmul.f32 %v453, %v492
  %v494 = vrcp.pop %v474
  %v495 = vmul.f32 %v455, %v494
  %v496 = vrcp.pop %v477
  %v497 = vmul.f32 %v457, %v496
  %v498 = vrcp.pop %v480
  %v499 = vmul.f32 %v459, %v498
  %v500 = vrcp.pop %v483
  %v501 = vmul.f32 %v461, %v500
  %v502 = vrcp.pop %v486
  %v503 = vmul.f32 %v463, %v502
  %v504 = vrcp.pop %v489
  %v505 = vmul.f32 %v465, %v504
  %506 = vrot.lane.b32.xlu0 %v254, 64
  %v507 = vpop.permute.xlu0 %506
  %508 = vrot.lane.b32.xlu0 %v259, 64
  %v509 = vpop.permute.xlu0 %508
  %v513 = vsel %vm417, %v491, 0
  %v516 = vsel %vm417, %v493, 0
  %v519 = vsel %vm417, %v495, 0
  %v522 = vsel %vm417, %v497, 0
  %v525 = vsel %vm417, %v499, 0
  %v528 = vsel %vm417, %v501, 0
  %v531 = vsel %vm417, %v503, 0
  %v534 = vsel %vm417, %v505, 0
  %536 = vmatprep.subr.mxu0 0.0
  %537 = vmatpush1.msra.mxu0 %v507
  %538 = vmatprep.subr.mxu0 0.0
  %539 = vmatpush1.msra.mxu0 %v509
  %540 = vmatprep.subr.mxu0 0.0
  %541 = vmatpush1.msra.mxu0 0.0
  %542 = vmatprep.subr.mxu0 0.0
  %543 = vmatpush1.msra.mxu0 0.0
  %544 = vmatprep.subr.mxu0 0.0
  %545 = vmatpush1.msra.mxu0 0.0
  %546 = vmatprep.subr.mxu0 0.0
  %547 = vmatpush1.msra.mxu0 0.0
  %548 = vmatprep.subr.mxu0 0.0
  %549 = vmatpush1.msra.mxu0 0.0
  %550 = vmatprep.subr.mxu0 0.0
  %551 = vmatpush1.msra.mxu0 0.0
  %552 = vmatprep.subr.mxu0 0.0
  %553 = vmatpush1.msra.mxu0 0.0
  %554 = vmatprep.subr.mxu0 0.0
  %555 = vmatpush1.msra.mxu0 0.0
  %556 = vmatprep.subr.mxu0 0.0
  %557 = vmatpush1.msra.mxu0 0.0
  %558 = vmatprep.subr.mxu0 0.0
  %559 = vmatpush1.msra.mxu0 0.0
  %560 = vmatprep.subr.mxu0 0.0
  %561 = vmatpush1.msra.mxu0 0.0
  %562 = vmatprep.subr.mxu0 0.0
  %563 = vmatpush1.msra.mxu0 0.0
  %564 = vmatprep.subr.mxu0 0.0
  %565 = vmatpush1.msra.mxu0 0.0
  %566 = vmatprep.subr.mxu0 0.0
  %567 = vmatpush1.msra.mxu0 0.0
  %568 = vmatprep.subr.mxu0 0.0
  %569 = vmatpush1.msra.mxu0 0.0
  %570 = vmatprep.subr.mxu0 0.0
  %571 = vmatpush1.msra.mxu0 0.0
  %572 = vmatprep.subr.mxu0 0.0
  %573 = vmatpush1.msra.mxu0 0.0
  %574 = vmatprep.subr.mxu0 0.0
  %575 = vmatpush1.msra.mxu0 0.0
  %576 = vmatprep.subr.mxu0 0.0
  %577 = vmatpush1.msra.mxu0 0.0
  %578 = vmatprep.subr.mxu0 0.0
  %579 = vmatpush1.msra.mxu0 0.0
  %580 = vmatprep.subr.mxu0 0.0
  %581 = vmatpush1.msra.mxu0 0.0
  %582 = vmatprep.subr.mxu0 0.0
  %583 = vmatpush1.msra.mxu0 0.0
  %584 = vmatprep.subr.mxu0 0.0
  %585 = vmatpush1.msra.mxu0 0.0
  %586 = vmatprep.subr.mxu0 0.0
  %587 = vmatpush1.msra.mxu0 0.0
  %588 = vmatprep.subr.mxu0 0.0
  %589 = vmatpush1.msra.mxu0 0.0
  %590 = vmatprep.subr.mxu0 0.0
  %591 = vmatpush1.msra.mxu0 0.0
  %592 = vmatprep.subr.mxu0 0.0
  %593 = vmatpush1.msra.mxu0 0.0
  %594 = vmatprep.subr.mxu0 0.0
  %595 = vmatpush1.msra.mxu0 0.0
  %596 = vmatprep.subr.mxu0 0.0
  %597 = vmatpush1.msra.mxu0 0.0
  %598 = vmatprep.subr.mxu0 0.0
  %599 = vmatpush1.msra.mxu0 0.0
  %600 = vmatprep.mubr.f32.mxu0 0.0
  %601 = vmatmul.mubr.f32.gmra.mrb[0].mxu0 %v513
  %v602 = vpop.f32.mrb[0].mxu0
  %v603 = vadd.f32 0.0, %v602
  %v604 = vpop.f32.mrb[0].mxu0
  %605 = vmatprep.mubr.f32.mxu0 0.0
  %606 = vmatmul.mubr.f32.gmra.mrb[0].mxu0 %v516
  %v607 = vpop.f32.mrb[0].mxu0
  %v608 = vadd.f32 0.0, %v607
  %v609 = vpop.f32.mrb[0].mxu0
  %610 = vmatprep.mubr.f32.mxu0 0.0
  %611 = vmatmul.mubr.f32.gmra.mrb[0].mxu0 %v519
  %v612 = vpop.f32.mrb[0].mxu0
  %v613 = vadd.f32 0.0, %v612
  %v614 = vpop.f32.mrb[0].mxu0
  %615 = vmatprep.mubr.f32.mxu0 0.0
  %616 = vmatmul.mubr.f32.gmra.mrb[0].mxu0 %v522
  %v617 = vpop.f32.mrb[0].mxu0
  %v618 = vadd.f32 0.0, %v617
  %v619 = vpop.f32.mrb[0].mxu0
  %620 = vmatprep.mubr.f32.mxu0 0.0
  %621 = vmatmul.mubr.f32.gmra.mrb[0].mxu0 %v525
  %v622 = vpop.f32.mrb[0].mxu0
  %v623 = vadd.f32 0.0, %v622
  %v624 = vpop.f32.mrb[0].mxu0
  %625 = vmatprep.mubr.f32.mxu0 0.0
  %626 = vmatmul.mubr.f32.gmra.mrb[0].mxu0 %v528
  %v627 = vpop.f32.mrb[0].mxu0
  %v628 = vadd.f32 0.0, %v627
  %v629 = vpop.f32.mrb[0].mxu0
  %630 = vmatprep.mubr.f32.mxu0 0.0
  %631 = vmatmul.mubr.f32.gmra.mrb[0].mxu0 %v531
  %v632 = vpop.f32.mrb[0].mxu0
  %v633 = vadd.f32 0.0, %v632
  %v634 = vpop.f32.mrb[0].mxu0
  %635 = vmatprep.mubr.f32.mxu0 0.0
  %636 = vmatmul.mubr.f32.gmra.mrb[0].mxu0 %v534
  %v637 = vpop.f32.mrb[0].mxu0
  %v638 = vadd.f32 0.0, %v637
  %v639 = vpop.f32.mrb[0].mxu0
  %640 = vdwg.mxu0
  %v641 = vld [vmem:[%s2] sm:$0xff]
  %v642 = vld [vmem:[%s2 + $0x8] sm:$0xff]
  %v643 = vld [vmem:[%s2 + $0x10] sm:$0xff]
  %v644 = vld [vmem:[%s2 + $0x18] sm:$0xff]
  %v645 = vld [vmem:[%s2 + $0x20] sm:$0xff]
  %v646 = vld [vmem:[%s2 + $0x28] sm:$0xff]
  %v647 = vld [vmem:[%s2 + $0x30] sm:$0xff]
  %v648 = vld [vmem:[%s2 + $0x38] sm:$0xff]
  %v649 = vmul.f32 %v603, %v641
  %v650 = vmul.f32 %v608, %v642
  %v651 = vmul.f32 %v613, %v643
  %v652 = vmul.f32 %v618, %v644
  %v653 = vmul.f32 %v623, %v645
  %v654 = vmul.f32 %v628, %v646
  %v655 = vmul.f32 %v633, %v647
  %v656 = vmul.f32 %v638, %v648
  %v657 = vsel %vm180, %v649, 0.0
  %v658 = vsel %vm180, %v651, 0.0
  %v659 = vadd.f32 %v657, %v658
  %v660 = vsel %vm180, %v653, 0.0
  %v661 = vadd.f32 %v659, %v660
  %v662 = vsel %vm180, %v655, 0.0
  %v663 = vadd.f32 %v661, %v662
  %v664 = vsel %vm180, %v650, 0.0
  %v665 = vsel %vm180, %v652, 0.0
  %v666 = vadd.f32 %v664, %v665
  %v667 = vsel %vm180, %v654, 0.0
  %v668 = vadd.f32 %v666, %v667
  %v669 = vsel %vm180, %v656, 0.0
  %v670 = vadd.f32 %v668, %v669
  %v671 = vld [vmem:[%s8] sm:$0xff]
  %v672 = vld [vmem:[%s8 + $0x8] sm:$0xff]
  %v673 = vld [vmem:[%s8 + $0x10] sm:$0xff]
  %v674 = vld [vmem:[%s8 + $0x18] sm:$0xff]
  %v676 = vsel %vm180, %v663, 0
  %v679 = vsel %vm180, %v670, 0
  %681 = vmatprep.subr.mxu0 0.0
  %682 = vmatpush1.msra.mxu0 %v671
  %683 = vmatprep.subr.mxu0 0.0
  %684 = vmatpush1.msra.mxu0 %v672
  %685 = vmatprep.subr.mxu0 0.0
  %686 = vmatpush1.msra.mxu0 %v673
  %687 = vmatprep.subr.mxu0 0.0
  %688 = vmatpush1.msra.mxu0 %v674
  %689 = vmatprep.subr.mxu0 0.0
  %690 = vmatpush1.msra.mxu0 0.0
  %691 = vmatprep.subr.mxu0 0.0
  %692 = vmatpush1.msra.mxu0 0.0
  %693 = vmatprep.subr.mxu0 0.0
  %694 = vmatpush1.msra.mxu0 0.0
  %695 = vmatprep.subr.mxu0 0.0
  %696 = vmatpush1.msra.mxu0 0.0
  %697 = vmatprep.subr.mxu0 0.0
  %698 = vmatpush1.msra.mxu0 0.0
  %699 = vmatprep.subr.mxu0 0.0
  %700 = vmatpush1.msra.mxu0 0.0
  %701 = vmatprep.subr.mxu0 0.0
  %702 = vmatpush1.msra.mxu0 0.0
  %703 = vmatprep.subr.mxu0 0.0
  %704 = vmatpush1.msra.mxu0 0.0
  %705 = vmatprep.subr.mxu0 0.0
  %706 = vmatpush1.msra.mxu0 0.0
  %707 = vmatprep.subr.mxu0 0.0
  %708 = vmatpush1.msra.mxu0 0.0
  %709 = vmatprep.subr.mxu0 0.0
  %710 = vmatpush1.msra.mxu0 0.0
  %711 = vmatprep.subr.mxu0 0.0
  %712 = vmatpush1.msra.mxu0 0.0
  %713 = vmatprep.subr.mxu0 0.0
  %714 = vmatpush1.msra.mxu0 0.0
  %715 = vmatprep.subr.mxu0 0.0
  %716 = vmatpush1.msra.mxu0 0.0
  %717 = vmatprep.subr.mxu0 0.0
  %718 = vmatpush1.msra.mxu0 0.0
  %719 = vmatprep.subr.mxu0 0.0
  %720 = vmatpush1.msra.mxu0 0.0
  %721 = vmatprep.subr.mxu0 0.0
  %722 = vmatpush1.msra.mxu0 0.0
  %723 = vmatprep.subr.mxu0 0.0
  %724 = vmatpush1.msra.mxu0 0.0
  %725 = vmatprep.subr.mxu0 0.0
  %726 = vmatpush1.msra.mxu0 0.0
  %727 = vmatprep.subr.mxu0 0.0
  %728 = vmatpush1.msra.mxu0 0.0
  %729 = vmatprep.subr.mxu0 0.0
  %730 = vmatpush1.msra.mxu0 0.0
  %731 = vmatprep.subr.mxu0 0.0
  %732 = vmatpush1.msra.mxu0 0.0
  %733 = vmatprep.subr.mxu0 0.0
  %734 = vmatpush1.msra.mxu0 0.0
  %735 = vmatprep.subr.mxu0 0.0
  %736 = vmatpush1.msra.mxu0 0.0
  %737 = vmatprep.subr.mxu0 0.0
  %738 = vmatpush1.msra.mxu0 0.0
  %739 = vmatprep.subr.mxu0 0.0
  %740 = vmatpush1.msra.mxu0 0.0
  %741 = vmatprep.subr.mxu0 0.0
  %742 = vmatpush1.msra.mxu0 0.0
  %743 = vmatprep.subr.mxu0 0.0
  %744 = vmatpush1.msra.mxu0 0.0
  %745 = vmatprep.mubr.f32.mxu0 0.0
  %746 = vmatmul.mubr.f32.gmra.mrb[0].mxu0 %v676
  %v747 = vpop.f32.mrb[0].mxu0
  %v748 = vadd.f32 0.0, %v747
  %v749 = vpop.f32.mrb[0].mxu0
  %750 = vmatprep.mubr.f32.mxu0 0.0
  %751 = vmatmul.mubr.f32.gmra.mrb[0].mxu0 %v679
  %v752 = vpop.f32.mrb[0].mxu0
  %v753 = vadd.f32 0.0, %v752
  %v754 = vpop.f32.mrb[0].mxu0
  %755 = vdwg.mxu0
  %v756 = vadd.f32 %v167, %v748
  %v757 = vadd.f32 %v168, %v753
  %v758 = vld [vmem:[%s9] sm:$0x1]
  %v760 = vlaneseq
  %v761 = vshrl.u32 %v760, 7
  %v762 = vsub.s32 0, %v761
  %v763 = vrot.slane %v758, %v762
  %v765 = vadd.f32 %v756, %v763
  %v766 = vadd.f32 %v757, %v763
  %v767 = vsel %vm180, %v765, 0.0
  %768 = vadd.xlane.f32.xlu0 %v767
  %v769 = vpop.xlane.xlu0 %768
  %v770 = vsel %vm180, %v766, 0.0
  %771 = vadd.xlane.f32.xlu0 %v770
  %v772 = vpop.xlane.xlu0 %771
  %v773 = vrcp.pop 32.0
  %v774 = vmul.f32 %v769, %v773
  %v775 = vmul.f32 %v772, %v773
  %v776 = vsub.f32 %v765, %v774
  %v777 = vsub.f32 %v766, %v775
  %v778 = vmul.f32 %v776, %v776
  %v779 = vmul.f32 %v777, %v777
  %v780 = vsel %vm180, %v778, 0.0
  %781 = vadd.xlane.f32.xlu0 %v780
  %v782 = vpop.xlane.xlu0 %781
  %v783 = vsel %vm180, %v779, 0.0
  %784 = vadd.xlane.f32.xlu0 %v783
  %v785 = vpop.xlane.xlu0 %784
  %v786 = vmul.f32 %v782, %v773
  %v787 = vmul.f32 %v785, %v773
  %v788 = vadd.f32 %v786, 1e-05
  %v789 = vadd.f32 %v787, 1e-05
  %v790 = vrsqrt.pop %v788
  %v791 = vrsqrt.pop %v789
  %v792 = vmul.f32 %v776, %v790
  %v793 = vmul.f32 %v777, %v791
  %v794 = vld [vmem:[%s10] sm:$0x1]
  %v796 = vlaneseq
  %v797 = vshrl.u32 %v796, 7
  %v798 = vsub.s32 0, %v797
  %v799 = vrot.slane %v794, %v798
  %v801 = vmul.f32 %v792, %v799
  %v802 = vmul.f32 %v793, %v799
  %v803 = vld [vmem:[%s11] sm:$0x1]
  %v805 = vlaneseq
  %v806 = vshrl.u32 %v805, 7
  %v807 = vsub.s32 0, %v806
  %v808 = vrot.slane %v803, %v807
  %v810 = vadd.f32 %v801, %v808
  %v811 = vadd.f32 %v802, %v808
  %v812 = vmax.f32 %v810, 0.0
  %v813 = vmax.f32 %v811, 0.0
  %v814 = vld [vmem:[%s12] sm:$0xff]
  %v815 = vld [vmem:[%s12 + $0x8] sm:$0xff]
  %v816 = vld [vmem:[%s12 + $0x10] sm:$0xff]
  %v817 = vld [vmem:[%s12 + $0x18] sm:$0xff]
  %v818 = vld [vmem:[%s13] sm:$0x1]
  %v820 = vlaneseq
  %v821 = vshrl.u32 %v820, 7
  %v822 = vsub.s32 0, %v821
  %v823 = vrot.slane %v818, %v822
  %v826 = vsel %vm180, %v812, 0
  %v829 = vsel %vm180, %v813, 0
  %831 = vmatprep.subr.mxu0 0.0
  %832 = vmatpush1.msra.mxu0 %v814
  %833 = vmatprep.subr.mxu0 0.0
  %834 = vmatpush1.msra.mxu0 %v815
  %835 = vmatprep.subr.mxu0 0.0
  %836 = vmatpush1.msra.mxu0 %v816
  %837 = vmatprep.subr.mxu0 0.0
  %838 = vmatpush1.msra.mxu0 %v817
  %839 = vmatprep.subr.mxu0 0.0
  %840 = vmatpush1.msra.mxu0 0.0
  %841 = vmatprep.subr.mxu0 0.0
  %842 = vmatpush1.msra.mxu0 0.0
  %843 = vmatprep.subr.mxu0 0.0
  %844 = vmatpush1.msra.mxu0 0.0
  %845 = vmatprep.subr.mxu0 0.0
  %846 = vmatpush1.msra.mxu0 0.0
  %847 = vmatprep.subr.mxu0 0.0
  %848 = vmatpush1.msra.mxu0 0.0
  %849 = vmatprep.subr.mxu0 0.0
  %850 = vmatpush1.msra.mxu0 0.0
  %851 = vmatprep.subr.mxu0 0.0
  %852 = vmatpush1.msra.mxu0 0.0
  %853 = vmatprep.subr.mxu0 0.0
  %854 = vmatpush1.msra.mxu0 0.0
  %855 = vmatprep.subr.mxu0 0.0
  %856 = vmatpush1.msra.mxu0 0.0
  %857 = vmatprep.subr.mxu0 0.0
  %858 = vmatpush1.msra.mxu0 0.0
  %859 = vmatprep.subr.mxu0 0.0
  %860 = vmatpush1.msra.mxu0 0.0
  %861 = vmatprep.subr.mxu0 0.0
  %862 = vmatpush1.msra.mxu0 0.0
  %863 = vmatprep.subr.mxu0 0.0
  %864 = vmatpush1.msra.mxu0 0.0
  %865 = vmatprep.subr.mxu0 0.0
  %866 = vmatpush1.msra.mxu0 0.0
  %867 = vmatprep.subr.mxu0 0.0
  %868 = vmatpush1.msra.mxu0 0.0
  %869 = vmatprep.subr.mxu0 0.0
  %870 = vmatpush1.msra.mxu0 0.0
  %871 = vmatprep.subr.mxu0 0.0
  %872 = vmatpush1.msra.mxu0 0.0
  %873 = vmatprep.subr.mxu0 0.0
  %874 = vmatpush1.msra.mxu0 0.0
  %875 = vmatprep.subr.mxu0 0.0
  %876 = vmatpush1.msra.mxu0 0.0
  %877 = vmatprep.subr.mxu0 0.0
  %878 = vmatpush1.msra.mxu0 0.0
  %879 = vmatprep.subr.mxu0 0.0
  %880 = vmatpush1.msra.mxu0 0.0
  %881 = vmatprep.subr.mxu0 0.0
  %882 = vmatpush1.msra.mxu0 0.0
  %883 = vmatprep.subr.mxu0 0.0
  %884 = vmatpush1.msra.mxu0 0.0
  %885 = vmatprep.subr.mxu0 0.0
  %886 = vmatpush1.msra.mxu0 0.0
  %887 = vmatprep.subr.mxu0 0.0
  %888 = vmatpush1.msra.mxu0 0.0
  %889 = vmatprep.subr.mxu0 0.0
  %890 = vmatpush1.msra.mxu0 0.0
  %891 = vmatprep.subr.mxu0 0.0
  %892 = vmatpush1.msra.mxu0 0.0
  %893 = vmatprep.subr.mxu0 0.0
  %894 = vmatpush1.msra.mxu0 0.0
  %895 = vmatprep.mubr.f32.mxu0 0.0
  %896 = vmatmul.mubr.f32.gmra.mrb[0].mxu0 %v826
  %v897 = vpop.f32.mrb[0].mxu0
  %v898 = vadd.f32 %v823, %v897
  %v899 = vpop.f32.mrb[0].mxu0
  %900 = vmatprep.mubr.f32.mxu0 0.0
  %901 = vmatmul.mubr.f32.gmra.mrb[0].mxu0 %v829
  %v902 = vpop.f32.mrb[0].mxu0
  %v903 = vadd.f32 %v823, %v902
  %v904 = vpop.f32.mrb[0].mxu0
  %905 = vdwg.mxu0
  %v906 = vmax.f32 %v898, 0.0
  %v907 = vmax.f32 %v903, 0.0
  %v908 = vld [vmem:[%s14] sm:$0xff]
  %v909 = vld [vmem:[%s14 + $0x8] sm:$0xff]
  %v910 = vld [vmem:[%s14 + $0x10] sm:$0xff]
  %v911 = vld [vmem:[%s14 + $0x18] sm:$0xff]
  %v912 = vld [vmem:[%s14 + $0x20] sm:$0xff]
  %v913 = vld [vmem:[%s14 + $0x28] sm:$0xff]
  %v914 = vld [vmem:[%s14 + $0x30] sm:$0xff]
  %v915 = vld [vmem:[%s14 + $0x38] sm:$0xff]
  %v916 = vld [vmem:[%s14 + $0x40] sm:$0xff]
  %v917 = vld [vmem:[%s14 + $0x48] sm:$0xff]
  %v918 = vld [vmem:[%s14 + $0x50] sm:$0xff]
  %v919 = vld [vmem:[%s14 + $0x58] sm:$0xff]
  %v920 = vld [vmem:[%s14 + $0x60] sm:$0xff]
  %v921 = vld [vmem:[%s14 + $0x68] sm:$0xff]
  %v922 = vld [vmem:[%s14 + $0x70] sm:$0xff]
  %v923 = vld [vmem:[%s14 + $0x78] sm:$0xff]
  %v924 = vld [vmem:[%s14 + $0x80] sm:$0xff]
  %v925 = vld [vmem:[%s14 + $0x88] sm:$0xff]
  %v926 = vld [vmem:[%s14 + $0x90] sm:$0xff]
  %v927 = vld [vmem:[%s14 + $0x98] sm:$0xff]
  %v928 = vld [vmem:[%s14 + $0xa0] sm:$0xff]
  %v929 = vld [vmem:[%s14 + $0xa8] sm:$0xff]
  %v930 = vld [vmem:[%s14 + $0xb0] sm:$0xff]
  %v931 = vld [vmem:[%s14 + $0xb8] sm:$0xff]
  %v932 = vld [vmem:[%s14 + $0xc0] sm:$0xff]
  %v933 = vld [vmem:[%s14 + $0xc8] sm:$0xff]
  %v934 = vld [vmem:[%s14 + $0xd0] sm:$0xff]
  %v935 = vld [vmem:[%s14 + $0xd8] sm:$0xff]
  %v936 = vld [vmem:[%s14 + $0xe0] sm:$0xff]
  %v937 = vld [vmem:[%s14 + $0xe8] sm:$0xff]
  %v938 = vld [vmem:[%s14 + $0xf0] sm:$0xff]
  %v939 = vld [vmem:[%s14 + $0xf8] sm:$0xff]
  %v940 = vld [vmem:[%s14 + $0x100] sm:$0xff]
  %v941 = vld [vmem:[%s14 + $0x108] sm:$0xff]
  %v942 = vld [vmem:[%s14 + $0x110] sm:$0xff]
  %v943 = vld [vmem:[%s14 + $0x118] sm:$0xff]
  %v944 = vld [vmem:[%s14 + $0x120] sm:$0xff]
  %v945 = vld [vmem:[%s14 + $0x128] sm:$0xff]
  %v946 = vld [vmem:[%s14 + $0x130] sm:$0xff]
  %v947 = vld [vmem:[%s14 + $0x138] sm:$0xff]
  %v948 = vld [vmem:[%s14 + $0x140] sm:$0xff]
  %v949 = vld [vmem:[%s14 + $0x148] sm:$0xff]
  %v950 = vld [vmem:[%s14 + $0x150] sm:$0xff]
  %v951 = vld [vmem:[%s14 + $0x158] sm:$0xff]
  %v952 = vld [vmem:[%s14 + $0x160] sm:$0xff]
  %v953 = vld [vmem:[%s14 + $0x168] sm:$0xff]
  %v954 = vld [vmem:[%s14 + $0x170] sm:$0xff]
  %v955 = vld [vmem:[%s14 + $0x178] sm:$0xff]
  %v956 = vld [vmem:[%s15] sm:$0x7]
  %v958 = vlaneseq
  %v959 = vshrl.u32 %v958, 7
  %v960 = vsub.s32 0, %v959
  %v961 = vrot.slane %v956, %v960
  %v962 = vlaneseq
  %v963 = vshrl.u32 %v962, 7
  %v964 = vsub.s32 1, %v963
  %v965 = vrot.slane %v956, %v964
  %v966 = vlaneseq
  %v967 = vshrl.u32 %v966, 7
  %v968 = vsub.s32 2, %v967
  %v969 = vrot.slane %v956, %v968
  %973 = vmatprep.subr.mxu0 %v909
  %974 = vmatpush1.msra.mxu0 %v908
  %975 = vmatprep.subr.mxu0 %v912
  %976 = vmatpush1.msra.mxu0 %v911
  %977 = vmatprep.subr.mxu0 %v915
  %978 = vmatpush1.msra.mxu0 %v914
  %979 = vmatprep.subr.mxu0 %v918
  %980 = vmatpush1.msra.mxu0 %v917
  %981 = vmatprep.subr.mxu0 %v921
  %982 = vmatpush1.msra.mxu0 %v920
  %983 = vmatprep.subr.mxu0 %v924
  %984 = vmatpush1.msra.mxu0 %v923
  %985 = vmatprep.subr.mxu0 %v927
  %986 = vmatpush1.msra.mxu0 %v926
  %987 = vmatprep.subr.mxu0 %v930
  %988 = vmatpush1.msra.mxu0 %v929
  %989 = vmatprep.subr.mxu0 %v933
  %990 = vmatpush1.msra.mxu0 %v932
  %991 = vmatprep.subr.mxu0 %v936
  %992 = vmatpush1.msra.mxu0 %v935
  %993 = vmatprep.subr.mxu0 %v939
  %994 = vmatpush1.msra.mxu0 %v938
  %995 = vmatprep.subr.mxu0 %v942
  %996 = vmatpush1.msra.mxu0 %v941
  %997 = vmatprep.subr.mxu0 %v945
  %998 = vmatpush1.msra.mxu0 %v944
  %999 = vmatprep.subr.mxu0 %v948
  %1000 = vmatpush1.msra.mxu0 %v947
  %1001 = vmatprep.subr.mxu0 %v951
  %1002 = vmatpush1.msra.mxu0 %v950
  %1003 = vmatprep.subr.mxu0 %v954
  %1004 = vmatpush1.msra.mxu0 %v953
  %1005 = vmatprep.subr.mxu0 0.0
  %1006 = vmatpush1.msra.mxu0 0.0
  %1007 = vmatprep.subr.mxu0 0.0
  %1008 = vmatpush1.msra.mxu0 0.0
  %1009 = vmatprep.subr.mxu0 0.0
  %1010 = vmatpush1.msra.mxu0 0.0
  %1011 = vmatprep.subr.mxu0 0.0
  %1012 = vmatpush1.msra.mxu0 0.0
  %1013 = vmatprep.subr.mxu0 0.0
  %1014 = vmatpush1.msra.mxu0 0.0
  %1015 = vmatprep.subr.mxu0 0.0
  %1016 = vmatpush1.msra.mxu0 0.0
  %1017 = vmatprep.subr.mxu0 0.0
  %1018 = vmatpush1.msra.mxu0 0.0
  %1019 = vmatprep.subr.mxu0 0.0
  %1020 = vmatpush1.msra.mxu0 0.0
  %1021 = vmatprep.subr.mxu0 0.0
  %1022 = vmatpush1.msra.mxu0 0.0
  %1023 = vmatprep.subr.mxu0 0.0
  %1024 = vmatpush1.msra.mxu0 0.0
  %1025 = vmatprep.subr.mxu0 0.0
  %1026 = vmatpush1.msra.mxu0 0.0
  %1027 = vmatprep.subr.mxu0 0.0
  %1028 = vmatpush1.msra.mxu0 0.0
  %1029 = vmatprep.subr.mxu0 0.0
  %1030 = vmatpush1.msra.mxu0 0.0
  %1031 = vmatprep.subr.mxu0 0.0
  %1032 = vmatpush1.msra.mxu0 0.0
  %1033 = vmatprep.subr.mxu0 0.0
  %1034 = vmatpush1.msra.mxu0 0.0
  %1035 = vmatprep.subr.mxu0 0.0
  %1036 = vmatpush1.msra.mxu0 0.0
  %1037 = vmatprep.mubr.f32.mxu0 0.0
  %1038 = vmatmul.mubr.f32.gmra.mrb[0].mxu0 %v906
  %v1039 = vpop.f32.mrb[0].mxu0
  %v1040 = vadd.f32 %v961, %v1039
  %v1041 = vpop.f32.mrb[0].mxu0
  %v1042 = vadd.f32 %v965, %v1041
  %1043 = vmatprep.mubr.f32.mxu0 0.0
  %1044 = vmatmul.mubr.f32.gmra.mrb[0].mxu0 %v907
  %v1045 = vpop.f32.mrb[0].mxu0
  %v1046 = vadd.f32 %v961, %v1045
  %v1047 = vpop.f32.mrb[0].mxu0
  %v1048 = vadd.f32 %v965, %v1047
  %1049 = vdwg.mxu0
  %1050 = vmatprep.subr.mxu0 0.0
  %1051 = vmatpush1.msra.mxu0 %v910
  %1052 = vmatprep.subr.mxu0 0.0
  %1053 = vmatpush1.msra.mxu0 %v913
  %1054 = vmatprep.subr.mxu0 0.0
  %1055 = vmatpush1.msra.mxu0 %v916
  %1056 = vmatprep.subr.mxu0 0.0
  %1057 = vmatpush1.msra.mxu0 %v919
  %1058 = vmatprep.subr.mxu0 0.0
  %1059 = vmatpush1.msra.mxu0 %v922
  %1060 = vmatprep.subr.mxu0 0.0
  %1061 = vmatpush1.msra.mxu0 %v925
  %1062 = vmatprep.subr.mxu0 0.0
  %1063 = vmatpush1.msra.mxu0 %v928
  %1064 = vmatprep.subr.mxu0 0.0
  %1065 = vmatpush1.msra.mxu0 %v931
  %1066 = vmatprep.subr.mxu0 0.0
  %1067 = vmatpush1.msra.mxu0 %v934
  %1068 = vmatprep.subr.mxu0 0.0
  %1069 = vmatpush1.msra.mxu0 %v937
  %1070 = vmatprep.subr.mxu0 0.0
  %1071 = vmatpush1.msra.mxu0 %v940
  %1072 = vmatprep.subr.mxu0 0.0
  %1073 = vmatpush1.msra.mxu0 %v943
  %1074 = vmatprep.subr.mxu0 0.0
  %1075 = vmatpush1.msra.mxu0 %v946
  %1076 = vmatprep.subr.mxu0 0.0
  %1077 = vmatpush1.msra.mxu0 %v949
  %1078 = vmatprep.subr.mxu0 0.0
  %1079 = vmatpush1.msra.mxu0 %v952
  %1080 = vmatprep.subr.mxu0 0.0
  %1081 = vmatpush1.msra.mxu0 %v955
  %1082 = vmatprep.subr.mxu0 0.0
  %1083 = vmatpush1.msra.mxu0 0.0
  %1084 = vmatprep.subr.mxu0 0.0
  %1085 = vmatpush1.msra.mxu0 0.0
  %1086 = vmatprep.subr.mxu0 0.0
  %1087 = vmatpush1.msra.mxu0 0.0
  %1088 = vmatprep.subr.mxu0 0.0
  %1089 = vmatpush1.msra.mxu0 0.0
  %1090 = vmatprep.subr.mxu0 0.0
  %1091 = vmatpush1.msra.mxu0 0.0
  %1092 = vmatprep.subr.mxu0 0.0
  %1093 = vmatpush1.msra.mxu0 0.0
  %1094 = vmatprep.subr.mxu0 0.0
  %1095 = vmatpush1.msra.mxu0 0.0
  %1096 = vmatprep.subr.mxu0 0.0
  %1097 = vmatpush1.msra.mxu0 0.0
  %1098 = vmatprep.subr.mxu0 0.0
  %1099 = vmatpush1.msra.mxu0 0.0
  %1100 = vmatprep.subr.mxu0 0.0
  %1101 = vmatpush1.msra.mxu0 0.0
  %1102 = vmatprep.subr.mxu0 0.0
  %1103 = vmatpush1.msra.mxu0 0.0
  %1104 = vmatprep.subr.mxu0 0.0
  %1105 = vmatpush1.msra.mxu0 0.0
  %1106 = vmatprep.subr.mxu0 0.0
  %1107 = vmatpush1.msra.mxu0 0.0
  %1108 = vmatprep.subr.mxu0 0.0
  %1109 = vmatpush1.msra.mxu0 0.0
  %1110 = vmatprep.subr.mxu0 0.0
  %1111 = vmatpush1.msra.mxu0 0.0
  %1112 = vmatprep.subr.mxu0 0.0
  %1113 = vmatpush1.msra.mxu0 0.0
  %1114 = vmatprep.mubr.f32.mxu0 0.0
  %1115 = vmatmul.mubr.f32.gmra.mrb[0].mxu0 %v906
  %v1116 = vpop.f32.mrb[0].mxu0
  %v1117 = vadd.f32 %v969, %v1116
  %v1118 = vpop.f32.mrb[0].mxu0
  %1119 = vmatprep.mubr.f32.mxu0 0.0
  %1120 = vmatmul.mubr.f32.gmra.mrb[0].mxu0 %v907
  %v1121 = vpop.f32.mrb[0].mxu0
  %v1122 = vadd.f32 %v969, %v1121
  %v1123 = vpop.f32.mrb[0].mxu0
  %1124 = vdwg.mxu0
  %v1125 = vld [vmem:[%s3] sm:$0xff]
  %v1126 = vld [vmem:[%s3 + $0x8] sm:$0xff]
  %v1127 = vld [vmem:[%s3 + $0x10] sm:$0xff]
  %v1128 = vld [vmem:[%s3 + $0x18] sm:$0xff]
  %v1129 = vld [vmem:[%s3 + $0x20] sm:$0xff]
  %v1130 = vld [vmem:[%s3 + $0x28] sm:$0xff]
  %v1131 = vld [vmem:[%s3 + $0x30] sm:$0xff]
  %v1132 = vld [vmem:[%s3 + $0x38] sm:$0xff]
  %v1133 = vmul.f32 %v1040, %v1125
  %v1134 = vmul.f32 %v1046, %v1126
  %v1135 = vmul.f32 %v1040, %v1127
  %v1136 = vmul.f32 %v1046, %v1128
  %v1137 = vmul.f32 %v1040, %v1129
  %v1138 = vmul.f32 %v1046, %v1130
  %v1139 = vmul.f32 %v1040, %v1131
  %v1140 = vmul.f32 %v1046, %v1132
  %1141 = vmatprep.subr.mxu0 0.0
  %1142 = vmatpush1.xpose.msra.mxu0 %v1042
  %1143 = vmatprep.subr.mxu0 0.0
  %1144 = vmatpush1.xpose.msra.mxu0 %v1048
  %1145 = vmatprep.subr.mxu0 0.0
  %1146 = vmatpush1.xpose.msra.mxu0 0.0
  %1147 = vmatprep.subr.mxu0 0.0
  %1148 = vmatpush1.xpose.msra.mxu0 0.0
  %1149 = vmatprep.subr.mxu0 0.0
  %1150 = vmatpush1.xpose.msra.mxu0 0.0
  %1151 = vmatprep.subr.mxu0 0.0
  %1152 = vmatpush1.xpose.msra.mxu0 0.0
  %1153 = vmatprep.subr.mxu0 0.0
  %1154 = vmatpush1.xpose.msra.mxu0 0.0
  %1155 = vmatprep.subr.mxu0 0.0
  %1156 = vmatpush1.xpose.msra.mxu0 0.0
  %1157 = vmatprep.subr.mxu0 0.0
  %1158 = vmatpush1.xpose.msra.mxu0 0.0
  %1159 = vmatprep.subr.mxu0 0.0
  %1160 = vmatpush1.xpose.msra.mxu0 0.0
  %1161 = vmatprep.subr.mxu0 0.0
  %1162 = vmatpush1.xpose.msra.mxu0 0.0
  %1163 = vmatprep.subr.mxu0 0.0
  %1164 = vmatpush1.xpose.msra.mxu0 0.0
  %1165 = vmatprep.subr.mxu0 0.0
  %1166 = vmatpush1.xpose.msra.mxu0 0.0
  %1167 = vmatprep.subr.mxu0 0.0
  %1168 = vmatpush1.xpose.msra.mxu0 0.0
  %1169 = vmatprep.subr.mxu0 0.0
  %1170 = vmatpush1.xpose.msra.mxu0 0.0
  %1171 = vmatprep.subr.mxu0 0.0
  %1172 = vmatpush1.xpose.msra.mxu0 0.0
  %1173 = vmatprep.subr.mxu0 0.0
  %1174 = vmatpush1.xpose.msra.mxu0 0.0
  %1175 = vmatprep.subr.mxu0 0.0
  %1176 = vmatpush1.xpose.msra.mxu0 0.0
  %1177 = vmatprep.subr.mxu0 0.0
  %1178 = vmatpush1.xpose.msra.mxu0 0.0
  %1179 = vmatprep.subr.mxu0 0.0
  %1180 = vmatpush1.xpose.msra.mxu0 0.0
  %1181 = vmatprep.subr.mxu0 0.0
  %1182 = vmatpush1.xpose.msra.mxu0 0.0
  %1183 = vmatprep.subr.mxu0 0.0
  %1184 = vmatpush1.xpose.msra.mxu0 0.0
  %1185 = vmatprep.subr.mxu0 0.0
  %1186 = vmatpush1.xpose.msra.mxu0 0.0
  %1187 = vmatprep.subr.mxu0 0.0
  %1188 = vmatpush1.xpose.msra.mxu0 0.0
  %1189 = vmatprep.subr.mxu0 0.0
  %1190 = vmatpush1.xpose.msra.mxu0 0.0
  %1191 = vmatprep.subr.mxu0 0.0
  %1192 = vmatpush1.xpose.msra.mxu0 0.0
  %1193 = vmatprep.subr.mxu0 0.0
  %1194 = vmatpush1.xpose.msra.mxu0 0.0
  %1195 = vmatprep.subr.mxu0 0.0
  %1196 = vmatpush1.xpose.msra.mxu0 0.0
  %1197 = vmatprep.subr.mxu0 0.0
  %1198 = vmatpush1.xpose.msra.mxu0 0.0
  %1199 = vmatprep.subr.mxu0 0.0
  %1200 = vmatpush1.xpose.msra.mxu0 0.0
  %1201 = vmatprep.subr.mxu0 0.0
  %1202 = vmatpush1.xpose.msra.mxu0 0.0
  %1203 = vmatprep.subr.mxu0 0.0
  %1204 = vmatpush1.xpose.msra.mxu0 0.0
  %1205 = vmatprep.mubr.f32.mxu0 0.0
  %1206 = vmatmul.mubr.f32.gmra.mrb[0].mxu0 %v1133
  %v1207 = vpop.f32.mrb[0].mxu0
  %v1208 = vadd.f32 %v65, %v1207
  %v1209 = vpop.f32.mrb[0].mxu0
  %1210 = vmatprep.mubr.f32.mxu0 0.0
  %1211 = vmatmul.mubr.f32.gmra.mrb[0].mxu0 %v1134
  %v1212 = vpop.f32.mrb[0].mxu0
  %v1213 = vadd.f32 %v66, %v1212
  %v1214 = vpop.f32.mrb[0].mxu0
  %1215 = vmatprep.mubr.f32.mxu0 0.0
  %1216 = vmatmul.mubr.f32.gmra.mrb[0].mxu0 %v1135
  %v1217 = vpop.f32.mrb[0].mxu0
  %v1218 = vadd.f32 %v65, %v1217
  %v1219 = vpop.f32.mrb[0].mxu0
  %1220 = vmatprep.mubr.f32.mxu0 0.0
  %1221 = vmatmul.mubr.f32.gmra.mrb[0].mxu0 %v1136
  %v1222 = vpop.f32.mrb[0].mxu0
  %v1223 = vadd.f32 %v66, %v1222
  %v1224 = vpop.f32.mrb[0].mxu0
  %1225 = vmatprep.mubr.f32.mxu0 0.0
  %1226 = vmatmul.mubr.f32.gmra.mrb[0].mxu0 %v1137
  %v1227 = vpop.f32.mrb[0].mxu0
  %v1228 = vadd.f32 %v65, %v1227
  %v1229 = vpop.f32.mrb[0].mxu0
  %1230 = vmatprep.mubr.f32.mxu0 0.0
  %1231 = vmatmul.mubr.f32.gmra.mrb[0].mxu0 %v1138
  %v1232 = vpop.f32.mrb[0].mxu0
  %v1233 = vadd.f32 %v66, %v1232
  %v1234 = vpop.f32.mrb[0].mxu0
  %1235 = vmatprep.mubr.f32.mxu0 0.0
  %1236 = vmatmul.mubr.f32.gmra.mrb[0].mxu0 %v1139
  %v1237 = vpop.f32.mrb[0].mxu0
  %v1238 = vadd.f32 %v65, %v1237
  %v1239 = vpop.f32.mrb[0].mxu0
  %1240 = vmatprep.mubr.f32.mxu0 0.0
  %1241 = vmatmul.mubr.f32.gmra.mrb[0].mxu0 %v1140
  %v1242 = vpop.f32.mrb[0].mxu0
  %v1243 = vadd.f32 %v66, %v1242
  %v1244 = vpop.f32.mrb[0].mxu0
  %1245 = vdwg.mxu0
  %v1246 = vsel %vm417, %v1208, -inf
  %1247 = vmax.xlane.f32.xlu0 %v1246
  %v1248 = vpop.xlane.xlu0 %1247
  %v1249 = vsel %vm417, %v1213, -inf
  %1250 = vmax.xlane.f32.xlu0 %v1249
  %v1251 = vpop.xlane.xlu0 %1250
  %v1252 = vsel %vm417, %v1218, -inf
  %1253 = vmax.xlane.f32.xlu0 %v1252
  %v1254 = vpop.xlane.xlu0 %1253
  %v1255 = vsel %vm417, %v1223, -inf
  %1256 = vmax.xlane.f32.xlu0 %v1255
  %v1257 = vpop.xlane.xlu0 %1256
  %v1258 = vsel %vm417, %v1228, -inf
  %1259 = vmax.xlane.f32.xlu0 %v1258
  %v1260 = vpop.xlane.xlu0 %1259
  %v1261 = vsel %vm417, %v1233, -inf
  %1262 = vmax.xlane.f32.xlu0 %v1261
  %v1263 = vpop.xlane.xlu0 %1262
  %v1264 = vsel %vm417, %v1238, -inf
  %1265 = vmax.xlane.f32.xlu0 %v1264
  %v1266 = vpop.xlane.xlu0 %1265
  %v1267 = vsel %vm417, %v1243, -inf
  %1268 = vmax.xlane.f32.xlu0 %v1267
  %v1269 = vpop.xlane.xlu0 %1268
  %v1270 = vsub.f32 %v1208, %v1248
  %v1271 = vsub.f32 %v1213, %v1251
  %v1272 = vsub.f32 %v1218, %v1254
  %v1273 = vsub.f32 %v1223, %v1257
  %v1274 = vsub.f32 %v1228, %v1260
  %v1275 = vsub.f32 %v1233, %v1263
  %v1276 = vsub.f32 %v1238, %v1266
  %v1277 = vsub.f32 %v1243, %v1269
  %v1278 = vmul.f32 %v1270, 1.442695
  %v1279 = vpow.pop %v1278
  %v1280 = vmul.f32 %v1271, 1.442695
  %v1281 = vpow.pop %v1280
  %v1282 = vmul.f32 %v1272, 1.442695
  %v1283 = vpow.pop %v1282
  %v1284 = vmul.f32 %v1273, 1.442695
  %v1285 = vpow.pop %v1284
  %v1286 = vmul.f32 %v1274, 1.442695
  %v1287 = vpow.pop %v1286
  %v1288 = vmul.f32 %v1275, 1.442695
  %v1289 = vpow.pop %v1288
  %v1290 = vmul.f32 %v1276, 1.442695
  %v1291 = vpow.pop %v1290
  %v1292 = vmul.f32 %v1277, 1.442695
  %v1293 = vpow.pop %v1292
  %v1294 = vsel %vm417, %v1279, 0.0
  %1295 = vadd.xlane.f32.xlu0 %v1294
  %v1296 = vpop.xlane.xlu0 %1295
  %v1297 = vsel %vm417, %v1281, 0.0
  %1298 = vadd.xlane.f32.xlu0 %v1297
  %v1299 = vpop.xlane.xlu0 %1298
  %v1300 = vsel %vm417, %v1283, 0.0
  %1301 = vadd.xlane.f32.xlu0 %v1300
  %v1302 = vpop.xlane.xlu0 %1301
  %v1303 = vsel %vm417, %v1285, 0.0
  %1304 = vadd.xlane.f32.xlu0 %v1303
  %v1305 = vpop.xlane.xlu0 %1304
  %v1306 = vsel %vm417, %v1287, 0.0
  %1307 = vadd.xlane.f32.xlu0 %v1306
  %v1308 = vpop.xlane.xlu0 %1307
  %v1309 = vsel %vm417, %v1289, 0.0
  %1310 = vadd.xlane.f32.xlu0 %v1309
  %v1311 = vpop.xlane.xlu0 %1310
  %v1312 = vsel %vm417, %v1291, 0.0
  %1313 = vadd.xlane.f32.xlu0 %v1312
  %v1314 = vpop.xlane.xlu0 %1313
  %v1315 = vsel %vm417, %v1293, 0.0
  %1316 = vadd.xlane.f32.xlu0 %v1315
  %v1317 = vpop.xlane.xlu0 %1316
  %v1318 = vrcp.pop %v1296
  %v1319 = vmul.f32 %v1279, %v1318
  %v1320 = vrcp.pop %v1299
  %v1321 = vmul.f32 %v1281, %v1320
  %v1322 = vrcp.pop %v1302
  %v1323 = vmul.f32 %v1283, %v1322
  %v1324 = vrcp.pop %v1305
  %v1325 = vmul.f32 %v1285, %v1324
  %v1326 = vrcp.pop %v1308
  %v1327 = vmul.f32 %v1287, %v1326
  %v1328 = vrcp.pop %v1311
  %v1329 = vmul.f32 %v1289, %v1328
  %v1330 = vrcp.pop %v1314
  %v1331 = vmul.f32 %v1291, %v1330
  %v1332 = vrcp.pop %v1317
  %v1333 = vmul.f32 %v1293, %v1332
  %v1335 = vsel %vm417, %v1319, 0
  %v1338 = vsel %vm417, %v1321, 0
  %v1341 = vsel %vm417, %v1323, 0
  %v1344 = vsel %vm417, %v1325, 0
  %v1347 = vsel %vm417, %v1327, 0
  %v1350 = vsel %vm417, %v1329, 0
  %v1353 = vsel %vm417, %v1331, 0
  %v1356 = vsel %vm417, %v1333, 0
  %1358 = vmatprep.subr.mxu0 0.0
  %1359 = vmatpush1.msra.mxu0 %v1117
  %1360 = vmatprep.subr.mxu0 0.0
  %1361 = vmatpush1.msra.mxu0 %v1122
  %1362 = vmatprep.subr.mxu0 0.0
  %1363 = vmatpush1.msra.mxu0 0.0
  %1364 = vmatprep.subr.mxu0 0.0
  %1365 = vmatpush1.msra.mxu0 0.0
  %1366 = vmatprep.subr.mxu0 0.0
  %1367 = vmatpush1.msra.mxu0 0.0
  %1368 = vmatprep.subr.mxu0 0.0
  %1369 = vmatpush1.msra.mxu0 0.0
  %1370 = vmatprep.subr.mxu0 0.0
  %1371 = vmatpush1.msra.mxu0 0.0
  %1372 = vmatprep.subr.mxu0 0.0
  %1373 = vmatpush1.msra.mxu0 0.0
  %1374 = vmatprep.subr.mxu0 0.0
  %1375 = vmatpush1.msra.mxu0 0.0
  %1376 = vmatprep.subr.mxu0 0.0
  %1377 = vmatpush1.msra.mxu0 0.0
  %1378 = vmatprep.subr.mxu0 0.0
  %1379 = vmatpush1.msra.mxu0 0.0
  %1380 = vmatprep.subr.mxu0 0.0
  %1381 = vmatpush1.msra.mxu0 0.0
  %1382 = vmatprep.subr.mxu0 0.0
  %1383 = vmatpush1.msra.mxu0 0.0
  %1384 = vmatprep.subr.mxu0 0.0
  %1385 = vmatpush1.msra.mxu0 0.0
  %1386 = vmatprep.subr.mxu0 0.0
  %1387 = vmatpush1.msra.mxu0 0.0
  %1388 = vmatprep.subr.mxu0 0.0
  %1389 = vmatpush1.msra.mxu0 0.0
  %1390 = vmatprep.subr.mxu0 0.0
  %1391 = vmatpush1.msra.mxu0 0.0
  %1392 = vmatprep.subr.mxu0 0.0
  %1393 = vmatpush1.msra.mxu0 0.0
  %1394 = vmatprep.subr.mxu0 0.0
  %1395 = vmatpush1.msra.mxu0 0.0
  %1396 = vmatprep.subr.mxu0 0.0
  %1397 = vmatpush1.msra.mxu0 0.0
  %1398 = vmatprep.subr.mxu0 0.0
  %1399 = vmatpush1.msra.mxu0 0.0
  %1400 = vmatprep.subr.mxu0 0.0
  %1401 = vmatpush1.msra.mxu0 0.0
  %1402 = vmatprep.subr.mxu0 0.0
  %1403 = vmatpush1.msra.mxu0 0.0
  %1404 = vmatprep.subr.mxu0 0.0
  %1405 = vmatpush1.msra.mxu0 0.0
  %1406 = vmatprep.subr.mxu0 0.0
  %1407 = vmatpush1.msra.mxu0 0.0
  %1408 = vmatprep.subr.mxu0 0.0
  %1409 = vmatpush1.msra.mxu0 0.0
  %1410 = vmatprep.subr.mxu0 0.0
  %1411 = vmatpush1.msra.mxu0 0.0
  %1412 = vmatprep.subr.mxu0 0.0
  %1413 = vmatpush1.msra.mxu0 0.0
  %1414 = vmatprep.subr.mxu0 0.0
  %1415 = vmatpush1.msra.mxu0 0.0
  %1416 = vmatprep.subr.mxu0 0.0
  %1417 = vmatpush1.msra.mxu0 0.0
  %1418 = vmatprep.subr.mxu0 0.0
  %1419 = vmatpush1.msra.mxu0 0.0
  %1420 = vmatprep.subr.mxu0 0.0
  %1421 = vmatpush1.msra.mxu0 0.0
  %1422 = vmatprep.mubr.f32.mxu0 0.0
  %1423 = vmatmul.mubr.f32.gmra.mrb[0].mxu0 %v1335
  %v1424 = vpop.f32.mrb[0].mxu0
  %v1425 = vadd.f32 0.0, %v1424
  %v1426 = vpop.f32.mrb[0].mxu0
  %1427 = vmatprep.mubr.f32.mxu0 0.0
  %1428 = vmatmul.mubr.f32.gmra.mrb[0].mxu0 %v1338
  %v1429 = vpop.f32.mrb[0].mxu0
  %v1430 = vadd.f32 0.0, %v1429
  %v1431 = vpop.f32.mrb[0].mxu0
  %1432 = vmatprep.mubr.f32.mxu0 0.0
  %1433 = vmatmul.mubr.f32.gmra.mrb[0].mxu0 %v1341
  %v1434 = vpop.f32.mrb[0].mxu0
  %v1435 = vadd.f32 0.0, %v1434
  %v1436 = vpop.f32.mrb[0].mxu0
  %1437 = vmatprep.mubr.f32.mxu0 0.0
  %1438 = vmatmul.mubr.f32.gmra.mrb[0].mxu0 %v1344
  %v1439 = vpop.f32.mrb[0].mxu0
  %v1440 = vadd.f32 0.0, %v1439
  %v1441 = vpop.f32.mrb[0].mxu0
  %1442 = vmatprep.mubr.f32.mxu0 0.0
  %1443 = vmatmul.mubr.f32.gmra.mrb[0].mxu0 %v1347
  %v1444 = vpop.f32.mrb[0].mxu0
  %v1445 = vadd.f32 0.0, %v1444
  %v1446 = vpop.f32.mrb[0].mxu0
  %1447 = vmatprep.mubr.f32.mxu0 0.0
  %1448 = vmatmul.mubr.f32.gmra.mrb[0].mxu0 %v1350
  %v1449 = vpop.f32.mrb[0].mxu0
  %v1450 = vadd.f32 0.0, %v1449
  %v1451 = vpop.f32.mrb[0].mxu0
  %1452 = vmatprep.mubr.f32.mxu0 0.0
  %1453 = vmatmul.mubr.f32.gmra.mrb[0].mxu0 %v1353
  %v1454 = vpop.f32.mrb[0].mxu0
  %v1455 = vadd.f32 0.0, %v1454
  %v1456 = vpop.f32.mrb[0].mxu0
  %1457 = vmatprep.mubr.f32.mxu0 0.0
  %1458 = vmatmul.mubr.f32.gmra.mrb[0].mxu0 %v1356
  %v1459 = vpop.f32.mrb[0].mxu0
  %v1460 = vadd.f32 0.0, %v1459
  %v1461 = vpop.f32.mrb[0].mxu0
  %1462 = vdwg.mxu0
  %v1463 = vld [vmem:[%s3] sm:$0xff]
  %v1464 = vld [vmem:[%s3 + $0x8] sm:$0xff]
  %v1465 = vld [vmem:[%s3 + $0x10] sm:$0xff]
  %v1466 = vld [vmem:[%s3 + $0x18] sm:$0xff]
  %v1467 = vld [vmem:[%s3 + $0x20] sm:$0xff]
  %v1468 = vld [vmem:[%s3 + $0x28] sm:$0xff]
  %v1469 = vld [vmem:[%s3 + $0x30] sm:$0xff]
  %v1470 = vld [vmem:[%s3 + $0x38] sm:$0xff]
  %v1471 = vmul.f32 %v1425, %v1463
  %v1472 = vmul.f32 %v1430, %v1464
  %v1473 = vmul.f32 %v1435, %v1465
  %v1474 = vmul.f32 %v1440, %v1466
  %v1475 = vmul.f32 %v1445, %v1467
  %v1476 = vmul.f32 %v1450, %v1468
  %v1477 = vmul.f32 %v1455, %v1469
  %v1478 = vmul.f32 %v1460, %v1470
  %v1479 = vadd.f32 %v1471, %v1473
  %v1480 = vadd.f32 %v1479, %v1475
  %v1481 = vadd.f32 %v1480, %v1477
  %v1482 = vadd.f32 %v1472, %v1474
  %v1483 = vadd.f32 %v1482, %v1476
  %v1484 = vadd.f32 %v1483, %v1478
  %v1485 = vld [vmem:[%s16] sm:$0xff]
  %v1486 = vld [vmem:[%s16 + $0x8] sm:$0xff]
  %v1487 = vld [vmem:[%s16 + $0x10] sm:$0xff]
  %v1488 = vld [vmem:[%s16 + $0x18] sm:$0xff]
  %v1489 = vld [vmem:[%s16 + $0x20] sm:$0xff]
  %v1490 = vld [vmem:[%s16 + $0x28] sm:$0xff]
  %v1491 = vld [vmem:[%s16 + $0x30] sm:$0xff]
  %v1492 = vld [vmem:[%s16 + $0x38] sm:$0xff]
  %v1493 = vld [vmem:[%s16 + $0x40] sm:$0xff]
  %v1494 = vld [vmem:[%s16 + $0x48] sm:$0xff]
  %v1495 = vld [vmem:[%s16 + $0x50] sm:$0xff]
  %v1496 = vld [vmem:[%s16 + $0x58] sm:$0xff]
  %v1497 = vld [vmem:[%s16 + $0x60] sm:$0xff]
  %v1498 = vld [vmem:[%s16 + $0x68] sm:$0xff]
  %v1499 = vld [vmem:[%s16 + $0x70] sm:$0xff]
  %v1500 = vld [vmem:[%s16 + $0x78] sm:$0xff]
  %1501 = vmatprep.subr.mxu0 0.0
  %1502 = vmatpush1.msra.mxu0 %v1485
  %1503 = vmatprep.subr.mxu0 0.0
  %1504 = vmatpush1.msra.mxu0 %v1486
  %1505 = vmatprep.subr.mxu0 0.0
  %1506 = vmatpush1.msra.mxu0 %v1487
  %1507 = vmatprep.subr.mxu0 0.0
  %1508 = vmatpush1.msra.mxu0 %v1488
  %1509 = vmatprep.subr.mxu0 0.0
  %1510 = vmatpush1.msra.mxu0 %v1489
  %1511 = vmatprep.subr.mxu0 0.0
  %1512 = vmatpush1.msra.mxu0 %v1490
  %1513 = vmatprep.subr.mxu0 0.0
  %1514 = vmatpush1.msra.mxu0 %v1491
  %1515 = vmatprep.subr.mxu0 0.0
  %1516 = vmatpush1.msra.mxu0 %v1492
  %1517 = vmatprep.subr.mxu0 0.0
  %1518 = vmatpush1.msra.mxu0 %v1493
  %1519 = vmatprep.subr.mxu0 0.0
  %1520 = vmatpush1.msra.mxu0 %v1494
  %1521 = vmatprep.subr.mxu0 0.0
  %1522 = vmatpush1.msra.mxu0 %v1495
  %1523 = vmatprep.subr.mxu0 0.0
  %1524 = vmatpush1.msra.mxu0 %v1496
  %1525 = vmatprep.subr.mxu0 0.0
  %1526 = vmatpush1.msra.mxu0 %v1497
  %1527 = vmatprep.subr.mxu0 0.0
  %1528 = vmatpush1.msra.mxu0 %v1498
  %1529 = vmatprep.subr.mxu0 0.0
  %1530 = vmatpush1.msra.mxu0 %v1499
  %1531 = vmatprep.subr.mxu0 0.0
  %1532 = vmatpush1.msra.mxu0 %v1500
  %1533 = vmatprep.subr.mxu0 0.0
  %1534 = vmatpush1.msra.mxu0 0.0
  %1535 = vmatprep.subr.mxu0 0.0
  %1536 = vmatpush1.msra.mxu0 0.0
  %1537 = vmatprep.subr.mxu0 0.0
  %1538 = vmatpush1.msra.mxu0 0.0
  %1539 = vmatprep.subr.mxu0 0.0
  %1540 = vmatpush1.msra.mxu0 0.0
  %1541 = vmatprep.subr.mxu0 0.0
  %1542 = vmatpush1.msra.mxu0 0.0
  %1543 = vmatprep.subr.mxu0 0.0
  %1544 = vmatpush1.msra.mxu0 0.0
  %1545 = vmatprep.subr.mxu0 0.0
  %1546 = vmatpush1.msra.mxu0 0.0
  %1547 = vmatprep.subr.mxu0 0.0
  %1548 = vmatpush1.msra.mxu0 0.0
  %1549 = vmatprep.subr.mxu0 0.0
  %1550 = vmatpush1.msra.mxu0 0.0
  %1551 = vmatprep.subr.mxu0 0.0
  %1552 = vmatpush1.msra.mxu0 0.0
  %1553 = vmatprep.subr.mxu0 0.0
  %1554 = vmatpush1.msra.mxu0 0.0
  %1555 = vmatprep.subr.mxu0 0.0
  %1556 = vmatpush1.msra.mxu0 0.0
  %1557 = vmatprep.subr.mxu0 0.0
  %1558 = vmatpush1.msra.mxu0 0.0
  %1559 = vmatprep.subr.mxu0 0.0
  %1560 = vmatpush1.msra.mxu0 0.0
  %1561 = vmatprep.subr.mxu0 0.0
  %1562 = vmatpush1.msra.mxu0 0.0
  %1563 = vmatprep.subr.mxu0 0.0
  %1564 = vmatpush1.msra.mxu0 0.0
  %1565 = vmatprep.mubr.f32.mxu0 0.0
  %1566 = vmatmul.mubr.f32.gmra.mrb[0].mxu0 %v1481
  %v1567 = vpop.f32.mrb[0].mxu0
  %v1568 = vadd.f32 0.0, %v1567
  %v1569 = vpop.f32.mrb[0].mxu0
  %1570 = vmatprep.mubr.f32.mxu0 0.0
  %1571 = vmatmul.mubr.f32.gmra.mrb[0].mxu0 %v1484
  %v1572 = vpop.f32.mrb[0].mxu0
  %v1573 = vadd.f32 0.0, %v1572
  %v1574 = vpop.f32.mrb[0].mxu0
  %1575 = vdwg.mxu0
  %v1576 = vadd.f32 %v906, %v1568
  %v1577 = vadd.f32 %v907, %v1573
  %v1578 = vld [vmem:[%s17] sm:$0x1]
  %v1580 = vlaneseq
  %v1581 = vshrl.u32 %v1580, 7
  %v1582 = vsub.s32 0, %v1581
  %v1583 = vrot.slane %v1578, %v1582
  %v1585 = vadd.f32 %v1576, %v1583
  %v1586 = vadd.f32 %v1577, %v1583
  %1587 = vadd.xlane.f32.xlu0 %v1585
  %v1588 = vpop.xlane.xlu0 %1587
  %1589 = vadd.xlane.f32.xlu0 %v1586
  %v1590 = vpop.xlane.xlu0 %1589
  %v1591 = vrcp.pop 128.0
  %v1592 = vmul.f32 %v1588, %v1591
  %v1593 = vmul.f32 %v1590, %v1591
  %v1594 = vsub.f32 %v1585, %v1592
  %v1595 = vsub.f32 %v1586, %v1593
  %v1596 = vmul.f32 %v1594, %v1594
  %v1597 = vmul.f32 %v1595, %v1595
  %1598 = vadd.xlane.f32.xlu0 %v1596
  %v1599 = vpop.xlane.xlu0 %1598
  %1600 = vadd.xlane.f32.xlu0 %v1597
  %v1601 = vpop.xlane.xlu0 %1600
  %v1602 = vmul.f32 %v1599, %v1591
  %v1603 = vmul.f32 %v1601, %v1591
  %v1604 = vadd.f32 %v1602, 1e-05
  %v1605 = vadd.f32 %v1603, 1e-05
  %v1606 = vrsqrt.pop %v1604
  %v1607 = vrsqrt.pop %v1605
  %v1608 = vmul.f32 %v1594, %v1606
  %v1609 = vmul.f32 %v1595, %v1607
  %v1610 = vld [vmem:[%s18] sm:$0x1]
  %v1612 = vlaneseq
  %v1613 = vshrl.u32 %v1612, 7
  %v1614 = vsub.s32 0, %v1613
  %v1615 = vrot.slane %v1610, %v1614
  %v1617 = vmul.f32 %v1608, %v1615
  %v1618 = vmul.f32 %v1609, %v1615
  %v1619 = vld [vmem:[%s19] sm:$0x1]
  %v1621 = vlaneseq
  %v1622 = vshrl.u32 %v1621, 7
  %v1623 = vsub.s32 0, %v1622
  %v1624 = vrot.slane %v1619, %v1623
  %v1626 = vadd.f32 %v1617, %v1624
  %v1627 = vadd.f32 %v1618, %v1624
  %v1628 = vmax.f32 %v1626, 0.0
  %v1629 = vmax.f32 %v1627, 0.0
  %1630 = vst [vmem:[%s20] sm:$0xff] %v1628
  %1631 = vst [vmem:[%s20 + $0x8] sm:$0xff] %v1629
  // Predicated region
  $region82: #{map_subnet_forward.1} parent=0 // pred_check
    _
  $region83: #{map_subnet_forward.1} parent=0 // pred_check_branch
    %1633 = sbr.rel (0) target = $region85
  $region84: #{map_subnet_forward.1} parent=0 // pred_region
    _
  $region85: #{map_subnet_forward.1} parent=0 // pred_fallthru
    _
  // Predicated region
  $region86: #{map_subnet_forward.1} parent=0 // pred_check
    _
  $region87: #{map_subnet_forward.1} parent=0 // pred_check_branch
    %1635 = sbr.rel (0) target = $region89
  $region88: #{map_subnet_forward.1} parent=0 // pred_region
    _
  $region89: #{map_subnet_forward.1} parent=0 // pred_fallthru
    _

</llo_original>
